<compile_context>
chip_gen: v7x
topology: tpu7x:2x2x1
jax: 0.10.0
libtpu: 0.0.40
codegen_flags: <defaults>
</compile_context>

<pallas_src>
import jax
import jax.numpy as jnp
from jax.experimental import pallas as pl
from jax.experimental.pallas import tpu as pltpu

NUM_CLASSES = 2                # module uses classes + 1 = 3 output units
CIN = 512
COUT1 = 1024
NUM_OUT = NUM_CLASSES + 1      # 3


def classifier_kernel(x_ref, w1_ref, b1_ref, w2_ref, b2_ref, o_ref):
    # x_ref:  (Bp, 512)     bf16  activations (whole padded batch, resident)
    # w1_ref: (512, 1024)   bf16  conv1 1x1 weight, layout (Cin, Cout), resident
    # b1_ref: (1, 1024)     f32
    # w2_ref: (1024, 3)     f32   linear weight, layout (in, out)
    # b2_ref: (1, 3)        f32
    # o_ref:  (Bp, 3)       f32   logits
    h = jnp.dot(x_ref[...], w1_ref[...], preferred_element_type=jnp.float32)
    h = jnp.maximum(h + b1_ref[...], 0.0)                      # bias + ReLU in f32
    o_ref[...] = (
        jnp.dot(h, w2_ref[...], preferred_element_type=jnp.float32) + b2_ref[...]
    )


def classifier_forward(x_nchw, w1_bf16, b1, w2, b2):
    """Forward pass equivalent to Classifier.forward (logits, no softmax).

    `w1_bf16` must already be bf16, layout (Cin, Cout) — cast once at init,
    NOT per call (see init_params).
    """
    B, C, H, W = x_nchw.shape
    assert C == CIN
    # Conv2d(kernel=1, stride=7): sample the spatial grid with stride 7.
    x_strided = x_nchw[:, :, ::7, ::7]                  # (B, 512, Ho, Wo)
    Ho, Wo = x_strided.shape[2], x_strided.shape[3]
    # Flatten -> Linear(1024, 3) requires Ho == Wo == 1 (as in the PyTorch model).
    assert Ho == 1 and Wo == 1, "input spatial dims must be <= 7 so conv output is 1x1"
    x2d = x_strided.reshape(B, C).astype(jnp.bfloat16)  # (B, 512) bf16

    # Pad batch to a multiple of 16 so the bf16 MXU LHS is not sublane-masked.
    B_pad = ((B + 15) // 16) * 16
    if B_pad != B:
        x2d = jnp.pad(x2d, ((0, B_pad - B), (0, 0)))

    cost = pl.CostEstimate(
        flops=2 * B_pad * CIN * COUT1 + 2 * B_pad * COUT1 * NUM_OUT,
        transcendentals=0,
        bytes_accessed=(w1_bf16.size * 2 + x2d.size * 2 + w2.size * 4
                        + b1.size * 4 + b2.size * 4 + B_pad * NUM_OUT * 4),
    )

    out = pl.pallas_call(
        classifier_kernel,
        out_shape=jax.ShapeDtypeStruct((B_pad, NUM_OUT), jnp.float32),
        in_specs=[
            pl.BlockSpec((B_pad, CIN), lambda: (0, 0)),      # x resident
            pl.BlockSpec((CIN, COUT1), lambda: (0, 0)),      # W1 resident (1 contiguous DMA)
            pl.BlockSpec((1, COUT1), lambda: (0, 0)),        # b1
            pl.BlockSpec((COUT1, NUM_OUT), lambda: (0, 0)),  # W2
            pl.BlockSpec((1, NUM_OUT), lambda: (0, 0)),      # b2
        ],
        out_specs=pl.BlockSpec((B_pad, NUM_OUT), lambda: (0, 0)),
        compiler_params=pltpu.CompilerParams(
            vmem_limit_bytes=32 << 20,   # everything resident is ~1.1 MiB; plenty
        ),
        cost_estimate=cost,
    )(x2d, w1_bf16, b1, w2, b2)
    return out[:B]


def init_params(key):
    k1, k2 = jax.random.split(key, 2)
    # conv1: kaiming_normal_(mode='fan_out', nonlinearity='relu')
    #   fan_out = out_channels * kh * kw = 1024 ; std = sqrt(2 / fan_out)
    conv_std = (2.0 / float(COUT1)) ** 0.5
    w1 = jax.random.normal(k1, (CIN, COUT1), dtype=jnp.float32) * conv_std   # (Cin, Cout)
    b1 = jnp.zeros((1, COUT1), dtype=jnp.float32)
    # output: xavier_normal_ ; std = sqrt(2 / (fan_in + fan_out)) = sqrt(2 / (1024 + 3))
    lin_std = (2.0 / (float(COUT1) + float(NUM_OUT))) ** 0.5
    w2 = jax.random.normal(k2, (COUT1, NUM_OUT), dtype=jnp.float32) * lin_std
    b2 = jnp.zeros((1, NUM_OUT), dtype=jnp.float32)
    # Hoist the bf16 cast out of the per-call path: the kernel consumes W1 in
    # bf16, so store it that way once here (halves W1 HBM bytes per forward
    # with zero per-call cast traffic).
    w1_bf16 = w1.astype(jnp.bfloat16)
    return w1_bf16, b1, w2, b2


if __name__ == "__main__":
    key = jax.random.PRNGKey(0)
    kx, kp = jax.random.split(key)
    # Input consistent with the module: NCHW, 512 channels, 7x7 spatial so the
    # 1x1/stride-7 conv yields a 1x1 map and Flatten produces 1024 features.
    x = jax.random.normal(kx, (2, 512, 7, 7), dtype=jnp.float32)
    w1_bf16, b1, w2, b2 = init_params(kp)

    fwd = jax.jit(classifier_forward)
    logits = fwd(x, w1_bf16, b1, w2, b2)
    logits = jax.block_until_ready(logits)

    # Reference in plain JAX (same math, same bf16 matmul inputs, f32 accumulation).
    x2d = x[:, :, ::7, ::7].reshape(2, CIN)
    h_ref = jnp.maximum(
        jnp.dot(x2d.astype(jnp.bfloat16), w1_bf16,
                preferred_element_type=jnp.float32) + b1, 0.0)
    ref = jnp.dot(h_ref, w2, preferred_element_type=jnp.float32) + b2

    assert logits.shape == (2, NUM_OUT)
    assert jnp.allclose(logits, ref, atol=1e-2, rtol=1e-2)

    print("KERNEL_OK")
</pallas_src>

<mosaic_0001>
module attributes {stable_mosaic.version = 11 : i64} {
  func.func @classifier_kernel(%arg0: memref<16x512xbf16, #tpu.memory_space<vmem>>, %arg1: memref<512x1024xbf16, #tpu.memory_space<vmem>>, %arg2: memref<1x1024xf32, #tpu.memory_space<vmem>>, %arg3: memref<1024x3xf32, #tpu.memory_space<vmem>>, %arg4: memref<1x3xf32, #tpu.memory_space<vmem>>, %arg5: memref<16x3xf32, #tpu.memory_space<vmem>>) attributes {dimension_semantics = [], scalar_prefetch = 0 : i64, scratch_operands = 0 : i64, tpu.core_type = #tpu.core_type<tc>} {
    %c0 = arith.constant 0 : index
    %c0_0 = arith.constant 0 : index
    %0 = vector.load %arg0[%c0, %c0_0] : memref<16x512xbf16, #tpu.memory_space<vmem>>, vector<16x512xbf16>
    %c0_1 = arith.constant 0 : index
    %c0_2 = arith.constant 0 : index
    %1 = vector.load %arg1[%c0_1, %c0_2] : memref<512x1024xbf16, #tpu.memory_space<vmem>>, vector<512x1024xbf16>
    %cst = arith.constant dense<0.000000e+00> : vector<16x1024xf32>
    %2 = tpu.matmul %0, %1, %cst {dimension_numbers = #tpu.dot_dimension_numbers<[1], [0], [0], [1], [0, 0, 1, 1], [], []>} : vector<16x512xbf16>, vector<512x1024xbf16>, vector<16x1024xf32> -> vector<16x1024xf32>
    %c0_3 = arith.constant 0 : index
    %c0_4 = arith.constant 0 : index
    %3 = vector.load %arg2[%c0_3, %c0_4] : memref<1x1024xf32, #tpu.memory_space<vmem>>, vector<1x1024xf32>
    %4 = vector.broadcast %3 : vector<1x1024xf32> to vector<16x1024xf32>
    %5 = arith.addf %2, %4 : vector<16x1024xf32>
    %cst_5 = arith.constant 0.000000e+00 : f32
    %6 = vector.broadcast %cst_5 : f32 to vector<16x1024xf32>
    %7 = arith.maximumf %5, %6 : vector<16x1024xf32>
    %c0_6 = arith.constant 0 : index
    %c0_7 = arith.constant 0 : index
    %8 = vector.load %arg3[%c0_6, %c0_7] : memref<1024x3xf32, #tpu.memory_space<vmem>>, vector<1024x3xf32>
    %cst_8 = arith.constant dense<0.000000e+00> : vector<16x3xf32>
    %9 = tpu.matmul %7, %8, %cst_8 {dimension_numbers = #tpu.dot_dimension_numbers<[1], [0], [0], [1], [0, 0, 1, 1], [], []>} : vector<16x1024xf32>, vector<1024x3xf32>, vector<16x3xf32> -> vector<16x3xf32>
    %c0_9 = arith.constant 0 : index
    %c0_10 = arith.constant 0 : index
    %10 = vector.load %arg4[%c0_9, %c0_10] : memref<1x3xf32, #tpu.memory_space<vmem>>, vector<1x3xf32>
    %11 = vector.broadcast %10 : vector<1x3xf32> to vector<16x3xf32>
    %12 = arith.addf %9, %11 : vector<16x3xf32>
    %c0_11 = arith.constant 0 : index
    %c0_12 = arith.constant 0 : index
    %13 = vector.load %arg5[%c0_11, %c0_12] : memref<16x3xf32, #tpu.memory_space<vmem>>, vector<16x3xf32>
    tpu.vector_store %arg5[%c0_11, %c0_12], %12 {strides = array<i32>} : memref<16x3xf32, #tpu.memory_space<vmem>>, vector<16x3xf32>,
    return
  }
}

</mosaic_0001>

<llo_original>
// kernel: classifier_forward.1
$region0: #{classifier_forward.1}
  #allocation0 [shape = 'u32[]', space=smem, size = 0x4, offset = 0x4, fixed_abs, tag = 'smem constant byte address 0x4 - core index']
  #allocation1 [shape = 'u32[144,128]{1,0:T(1,128)}', space=vmem, size = 0x12000, scoped, tag = 'internal scratch']
  %s0 = inlined_call_operand.vmem [shape: bf16[16,512], index: 0, kind: input, shape index: {}]
  %s1 = inlined_call_operand.hbm [shape: bf16[512,1024], index: 1, kind: input, shape index: {}]
  %s2 = inlined_call_operand.vmem [shape: f32[1,1024], index: 2, kind: input, shape index: {}]
  %s3 = inlined_call_operand.vmem [shape: f32[1024,3], index: 3, kind: input, shape index: {}]
  %s4 = inlined_call_operand.vmem [shape: f32[1,3], index: 4, kind: input, shape index: {}]
  %s5 = inlined_call_operand.vmem [shape: f32[16,3], index: 5, kind: output, shape index: {}]
  %s6 = sld [smem:[#allocation0]]
  $region34: #{classifier_forward.1} parent=0
    _
  %s8 = ssub.s32 1, %s6
  %s9 = scalar_select 0, %s8, %s6
  $region1: #{classifier_forward.1} parent=0
    #allocation2 [shape = 'u8[1048576]{0}', space=vmem, size = 0x100000, scoped, tag = 'input window, operand 1, single buffered']
    #allocation3 [shape = 's32[1]{0}', space=sflag, size = 0x4, scoped, tag = 'scoped memory for classifier_forward.1']
    %10 = vsyncpa [#allocation3], 0
    // Predicated region
    $region2: #{classifier_forward.1} parent=1 // pred_check
      _
    $region3: #{classifier_forward.1} parent=1 // pred_check_branch
      %12 = sbr.rel (0) target = $region5
    $region4: #{classifier_forward.1} parent=1 // pred_region
      _
    $region5: #{classifier_forward.1} parent=1 // pred_fallthru
      _
    // Predicated region
    $region6: #{classifier_forward.1} parent=1 // pred_check
      _
    $region7: #{classifier_forward.1} parent=1 // pred_check_branch
      %14 = sbr.rel (0) target = $region9
    $region8: #{classifier_forward.1} parent=1 // pred_region
      %s16 = ssub.s32 32768, 32768
      %17 = vsyncadd [#allocation3], %s16
      %s18 = sshll.u32 [#allocation2], 4
      %s19 = int_to_ptr.vmem [resolvable:$true] %s18
      %24 = dma.hbm_to_vmem [thread:$0]  %s1, 32768, %s19, [#allocation3], 512, 512, 32
    $region9: #{classifier_forward.1} parent=1 // pred_fallthru
      _
    // Predicated region
    $region10: #{classifier_forward.1} parent=1 // pred_check
      _
    $region11: #{classifier_forward.1} parent=1 // pred_check_branch
      %26 = sbr.rel (0) target = $region13
    $region12: #{classifier_forward.1} parent=1 // pred_region
      _
    $region13: #{classifier_forward.1} parent=1 // pred_fallthru
      _
    // Predicated region
    $region14: #{classifier_forward.1} parent=1 // pred_check
      _
    $region15: #{classifier_forward.1} parent=1 // pred_check_branch
      %28 = sbr.rel (0) target = $region17
    $region16: #{classifier_forward.1} parent=1 // pred_region
      _
    $region17: #{classifier_forward.1} parent=1 // pred_fallthru
      _
    // Predicated region
    $region18: #{classifier_forward.1} parent=1 // pred_check
      _
    $region19: #{classifier_forward.1} parent=1 // pred_check_branch
      %30 = sbr.rel (0) target = $region21
    $region20: #{classifier_forward.1} parent=1 // pred_region
      _
    $region21: #{classifier_forward.1} parent=1 // pred_fallthru
      _
    // Predicated region
    $region22: #{classifier_forward.1} parent=1 // pred_check
      _
    $region23: #{classifier_forward.1} parent=1 // pred_check_branch
      %32 = sbr.rel (0) target = $region25
    $region24: #{classifier_forward.1} parent=1 // pred_region
      %33 = dma.done [#allocation3], 32768
    $region25: #{classifier_forward.1} parent=1 // pred_fallthru
      _
    %v34 = vld [vmem:[%s0] sm:$0xff]
    %v35 = vld [vmem:[%s0 + $0x8] sm:$0xff]
    %v36 = vld [vmem:[%s0 + $0x10] sm:$0xff]
    %v37 = vld [vmem:[%s0 + $0x18] sm:$0xff]
    %v38 = vld [vmem:[#allocation2] sm:$0xff]
    %v39 = vld [vmem:[#allocation2 + $0x8] sm:$0xff]
    %v40 = vld [vmem:[#allocation2 + $0x10] sm:$0xff]
    %v41 = vld [vmem:[#allocation2 + $0x18] sm:$0xff]
    %v42 = vld [vmem:[#allocation2 + $0x20] sm:$0xff]
    %v43 = vld [vmem:[#allocation2 + $0x28] sm:$0xff]
    %v44 = vld [vmem:[#allocation2 + $0x30] sm:$0xff]
    %v45 = vld [vmem:[#allocation2 + $0x38] sm:$0xff]
    %v46 = vld [vmem:[#allocation2 + $0x40] sm:$0xff]
    %v47 = vld [vmem:[#allocation2 + $0x48] sm:$0xff]
    %v48 = vld [vmem:[#allocation2 + $0x50] sm:$0xff]
    %v49 = vld [vmem:[#allocation2 + $0x58] sm:$0xff]
    %v50 = vld [vmem:[#allocation2 + $0x60] sm:$0xff]
    %v51 = vld [vmem:[#allocation2 + $0x68] sm:$0xff]
    %v52 = vld [vmem:[#allocation2 + $0x70] sm:$0xff]
    %v53 = vld [vmem:[#allocation2 + $0x78] sm:$0xff]
    %v54 = vld [vmem:[#allocation2 + $0x80] sm:$0xff]
    %v55 = vld [vmem:[#allocation2 + $0x88] sm:$0xff]
    %v56 = vld [vmem:[#allocation2 + $0x90] sm:$0xff]
    %v57 = vld [vmem:[#allocation2 + $0x98] sm:$0xff]
    %v58 = vld [vmem:[#allocation2 + $0xa0] sm:$0xff]
    %v59 = vld [vmem:[#allocation2 + $0xa8] sm:$0xff]
    %v60 = vld [vmem:[#allocation2 + $0xb0] sm:$0xff]
    %v61 = vld [vmem:[#allocation2 + $0xb8] sm:$0xff]
    %v62 = vld [vmem:[#allocation2 + $0xc0] sm:$0xff]
    %v63 = vld [vmem:[#allocation2 + $0xc8] sm:$0xff]
    %v64 = vld [vmem:[#allocation2 + $0xd0] sm:$0xff]
    %v65 = vld [vmem:[#allocation2 + $0xd8] sm:$0xff]
    %v66 = vld [vmem:[#allocation2 + $0xe0] sm:$0xff]
    %v67 = vld [vmem:[#allocation2 + $0xe8] sm:$0xff]
    %v68 = vld [vmem:[#allocation2 + $0xf0] sm:$0xff]
    %v69 = vld [vmem:[#allocation2 + $0xf8] sm:$0xff]
    %v70 = vld [vmem:[#allocation2 + $0x100] sm:$0xff]
    %v71 = vld [vmem:[#allocation2 + $0x108] sm:$0xff]
    %v72 = vld [vmem:[#allocation2 + $0x110] sm:$0xff]
    %v73 = vld [vmem:[#allocation2 + $0x118] sm:$0xff]
    %v74 = vld [vmem:[#allocation2 + $0x120] sm:$0xff]
    %v75 = vld [vmem:[#allocation2 + $0x128] sm:$0xff]
    %v76 = vld [vmem:[#allocation2 + $0x130] sm:$0xff]
    %v77 = vld [vmem:[#allocation2 + $0x138] sm:$0xff]
    %v78 = vld [vmem:[#allocation2 + $0x140] sm:$0xff]
    %v79 = vld [vmem:[#allocation2 + $0x148] sm:$0xff]
    %v80 = vld [vmem:[#allocation2 + $0x150] sm:$0xff]
    %v81 = vld [vmem:[#allocation2 + $0x158] sm:$0xff]
    %v82 = vld [vmem:[#allocation2 + $0x160] sm:$0xff]
    %v83 = vld [vmem:[#allocation2 + $0x168] sm:$0xff]
    %v84 = vld [vmem:[#allocation2 + $0x170] sm:$0xff]
    %v85 = vld [vmem:[#allocation2 + $0x178] sm:$0xff]
    %v86 = vld [vmem:[#allocation2 + $0x180] sm:$0xff]
    %v87 = vld [vmem:[#allocation2 + $0x188] sm:$0xff]
    %v88 = vld [vmem:[#allocation2 + $0x190] sm:$0xff]
    %v89 = vld [vmem:[#allocation2 + $0x198] sm:$0xff]
    %v90 = vld [vmem:[#allocation2 + $0x1a0] sm:$0xff]
    %v91 = vld [vmem:[#allocation2 + $0x1a8] sm:$0xff]
    %v92 = vld [vmem:[#allocation2 + $0x1b0] sm:$0xff]
    %v93 = vld [vmem:[#allocation2 + $0x1b8] sm:$0xff]
    %v94 = vld [vmem:[#allocation2 + $0x1c0] sm:$0xff]
    %v95 = vld [vmem:[#allocation2 + $0x1c8] sm:$0xff]
    %v96 = vld [vmem:[#allocation2 + $0x1d0] sm:$0xff]
    %v97 = vld [vmem:[#allocation2 + $0x1d8] sm:$0xff]
    %v98 = vld [vmem:[#allocation2 + $0x1e0] sm:$0xff]
    %v99 = vld [vmem:[#allocation2 + $0x1e8] sm:$0xff]
    %v100 = vld [vmem:[#allocation2 + $0x1f0] sm:$0xff]
    %v101 = vld [vmem:[#allocation2 + $0x1f8] sm:$0xff]
    %v102 = vld [vmem:[#allocation2 + $0x200] sm:$0xff]
    %v103 = vld [vmem:[#allocation2 + $0x208] sm:$0xff]
    %v104 = vld [vmem:[#allocation2 + $0x210] sm:$0xff]
    %v105 = vld [vmem:[#allocation2 + $0x218] sm:$0xff]
    %v106 = vld [vmem:[#allocation2 + $0x220] sm:$0xff]
    %v107 = vld [vmem:[#allocation2 + $0x228] sm:$0xff]
    %v108 = vld [vmem:[#allocation2 + $0x230] sm:$0xff]
    %v109 = vld [vmem:[#allocation2 + $0x238] sm:$0xff]
    %v110 = vld [vmem:[#allocation2 + $0x240] sm:$0xff]
    %v111 = vld [vmem:[#allocation2 + $0x248] sm:$0xff]
    %v112 = vld [vmem:[#allocation2 + $0x250] sm:$0xff]
    %v113 = vld [vmem:[#allocation2 + $0x258] sm:$0xff]
    %v114 = vld [vmem:[#allocation2 + $0x260] sm:$0xff]
    %v115 = vld [vmem:[#allocation2 + $0x268] sm:$0xff]
    %v116 = vld [vmem:[#allocation2 + $0x270] sm:$0xff]
    %v117 = vld [vmem:[#allocation2 + $0x278] sm:$0xff]
    %v118 = vld [vmem:[#allocation2 + $0x280] sm:$0xff]
    %v119 = vld [vmem:[#allocation2 + $0x288] sm:$0xff]
    %v120 = vld [vmem:[#allocation2 + $0x290] sm:$0xff]
    %v121 = vld [vmem:[#allocation2 + $0x298] sm:$0xff]
    %v122 = vld [vmem:[#allocation2 + $0x2a0] sm:$0xff]
    %v123 = vld [vmem:[#allocation2 + $0x2a8] sm:$0xff]
    %v124 = vld [vmem:[#allocation2 + $0x2b0] sm:$0xff]
    %v125 = vld [vmem:[#allocation2 + $0x2b8] sm:$0xff]
    %v126 = vld [vmem:[#allocation2 + $0x2c0] sm:$0xff]
    %v127 = vld [vmem:[#allocation2 + $0x2c8] sm:$0xff]
    %v128 = vld [vmem:[#allocation2 + $0x2d0] sm:$0xff]
    %v129 = vld [vmem:[#allocation2 + $0x2d8] sm:$0xff]
    %v130 = vld [vmem:[#allocation2 + $0x2e0] sm:$0xff]
    %v131 = vld [vmem:[#allocation2 + $0x2e8] sm:$0xff]
    %v132 = vld [vmem:[#allocation2 + $0x2f0] sm:$0xff]
    %v133 = vld [vmem:[#allocation2 + $0x2f8] sm:$0xff]
    %v134 = vld [vmem:[#allocation2 + $0x300] sm:$0xff]
    %v135 = vld [vmem:[#allocation2 + $0x308] sm:$0xff]
    %v136 = vld [vmem:[#allocation2 + $0x310] sm:$0xff]
    %v137 = vld [vmem:[#allocation2 + $0x318] sm:$0xff]
    %v138 = vld [vmem:[#allocation2 + $0x320] sm:$0xff]
    %v139 = vld [vmem:[#allocation2 + $0x328] sm:$0xff]
    %v140 = vld [vmem:[#allocation2 + $0x330] sm:$0xff]
    %v141 = vld [vmem:[#allocation2 + $0x338] sm:$0xff]
    %v142 = vld [vmem:[#allocation2 + $0x340] sm:$0xff]
    %v143 = vld [vmem:[#allocation2 + $0x348] sm:$0xff]
    %v144 = vld [vmem:[#allocation2 + $0x350] sm:$0xff]
    %v145 = vld [vmem:[#allocation2 + $0x358] sm:$0xff]
    %v146 = vld [vmem:[#allocation2 + $0x360] sm:$0xff]
    %v147 = vld [vmem:[#allocation2 + $0x368] sm:$0xff]
    %v148 = vld [vmem:[#allocation2 + $0x370] sm:$0xff]
    %v149 = vld [vmem:[#allocation2 + $0x378] sm:$0xff]
    %v150 = vld [vmem:[#allocation2 + $0x380] sm:$0xff]
    %v151 = vld [vmem:[#allocation2 + $0x388] sm:$0xff]
    %v152 = vld [vmem:[#allocation2 + $0x390] sm:$0xff]
    %v153 = vld [vmem:[#allocation2 + $0x398] sm:$0xff]
    %v154 = vld [vmem:[#allocation2 + $0x3a0] sm:$0xff]
    %v155 = vld [vmem:[#allocation2 + $0x3a8] sm:$0xff]
    %v156 = vld [vmem:[#allocation2 + $0x3b0] sm:$0xff]
    %v157 = vld [vmem:[#allocation2 + $0x3b8] sm:$0xff]
    %v158 = vld [vmem:[#allocation2 + $0x3c0] sm:$0xff]
    %v159 = vld [vmem:[#allocation2 + $0x3c8] sm:$0xff]
    %v160 = vld [vmem:[#allocation2 + $0x3d0] sm:$0xff]
    %v161 = vld [vmem:[#allocation2 + $0x3d8] sm:$0xff]
    %v162 = vld [vmem:[#allocation2 + $0x3e0] sm:$0xff]
    %v163 = vld [vmem:[#allocation2 + $0x3e8] sm:$0xff]
    %v164 = vld [vmem:[#allocation2 + $0x3f0] sm:$0xff]
    %v165 = vld [vmem:[#allocation2 + $0x3f8] sm:$0xff]
    %v166 = vld [vmem:[#allocation2 + $0x400] sm:$0xff]
    %v167 = vld [vmem:[#allocation2 + $0x408] sm:$0xff]
    %v168 = vld [vmem:[#allocation2 + $0x410] sm:$0xff]
    %v169 = vld [vmem:[#allocation2 + $0x418] sm:$0xff]
    %v170 = vld [vmem:[#allocation2 + $0x420] sm:$0xff]
    %v171 = vld [vmem:[#allocation2 + $0x428] sm:$0xff]
    %v172 = vld [vmem:[#allocation2 + $0x430] sm:$0xff]
    %v173 = vld [vmem:[#allocation2 + $0x438] sm:$0xff]
    %v174 = vld [vmem:[#allocation2 + $0x440] sm:$0xff]
    %v175 = vld [vmem:[#allocation2 + $0x448] sm:$0xff]
    %v176 = vld [vmem:[#allocation2 + $0x450] sm:$0xff]
    %v177 = vld [vmem:[#allocation2 + $0x458] sm:$0xff]
    %v178 = vld [vmem:[#allocation2 + $0x460] sm:$0xff]
    %v179 = vld [vmem:[#allocation2 + $0x468] sm:$0xff]
    %v180 = vld [vmem:[#allocation2 + $0x470] sm:$0xff]
    %v181 = vld [vmem:[#allocation2 + $0x478] sm:$0xff]
    %v182 = vld [vmem:[#allocation2 + $0x480] sm:$0xff]
    %v183 = vld [vmem:[#allocation2 + $0x488] sm:$0xff]
    %v184 = vld [vmem:[#allocation2 + $0x490] sm:$0xff]
    %v185 = vld [vmem:[#allocation2 + $0x498] sm:$0xff]
    %v186 = vld [vmem:[#allocation2 + $0x4a0] sm:$0xff]
    %v187 = vld [vmem:[#allocation2 + $0x4a8] sm:$0xff]
    %v188 = vld [vmem:[#allocation2 + $0x4b0] sm:$0xff]
    %v189 = vld [vmem:[#allocation2 + $0x4b8] sm:$0xff]
    %v190 = vld [vmem:[#allocation2 + $0x4c0] sm:$0xff]
    %v191 = vld [vmem:[#allocation2 + $0x4c8] sm:$0xff]
    %v192 = vld [vmem:[#allocation2 + $0x4d0] sm:$0xff]
    %v193 = vld [vmem:[#allocation2 + $0x4d8] sm:$0xff]
    %v194 = vld [vmem:[#allocation2 + $0x4e0] sm:$0xff]
    %v195 = vld [vmem:[#allocation2 + $0x4e8] sm:$0xff]
    %v196 = vld [vmem:[#allocation2 + $0x4f0] sm:$0xff]
    %v197 = vld [vmem:[#allocation2 + $0x4f8] sm:$0xff]
    %v198 = vld [vmem:[#allocation2 + $0x500] sm:$0xff]
    %v199 = vld [vmem:[#allocation2 + $0x508] sm:$0xff]
    %v200 = vld [vmem:[#allocation2 + $0x510] sm:$0xff]
    %v201 = vld [vmem:[#allocation2 + $0x518] sm:$0xff]
    %v202 = vld [vmem:[#allocation2 + $0x520] sm:$0xff]
    %v203 = vld [vmem:[#allocation2 + $0x528] sm:$0xff]
    %v204 = vld [vmem:[#allocation2 + $0x530] sm:$0xff]
    %v205 = vld [vmem:[#allocation2 + $0x538] sm:$0xff]
    %v206 = vld [vmem:[#allocation2 + $0x540] sm:$0xff]
    %v207 = vld [vmem:[#allocation2 + $0x548] sm:$0xff]
    %v208 = vld [vmem:[#allocation2 + $0x550] sm:$0xff]
    %v209 = vld [vmem:[#allocation2 + $0x558] sm:$0xff]
    %v210 = vld [vmem:[#allocation2 + $0x560] sm:$0xff]
    %v211 = vld [vmem:[#allocation2 + $0x568] sm:$0xff]
    %v212 = vld [vmem:[#allocation2 + $0x570] sm:$0xff]
    %v213 = vld [vmem:[#allocation2 + $0x578] sm:$0xff]
    %v214 = vld [vmem:[#allocation2 + $0x580] sm:$0xff]
    %v215 = vld [vmem:[#allocation2 + $0x588] sm:$0xff]
    %v216 = vld [vmem:[#allocation2 + $0x590] sm:$0xff]
    %v217 = vld [vmem:[#allocation2 + $0x598] sm:$0xff]
    %v218 = vld [vmem:[#allocation2 + $0x5a0] sm:$0xff]
    %v219 = vld [vmem:[#allocation2 + $0x5a8] sm:$0xff]
    %v220 = vld [vmem:[#allocation2 + $0x5b0] sm:$0xff]
    %v221 = vld [vmem:[#allocation2 + $0x5b8] sm:$0xff]
    %v222 = vld [vmem:[#allocation2 + $0x5c0] sm:$0xff]
    %v223 = vld [vmem:[#allocation2 + $0x5c8] sm:$0xff]
    %v224 = vld [vmem:[#allocation2 + $0x5d0] sm:$0xff]
    %v225 = vld [vmem:[#allocation2 + $0x5d8] sm:$0xff]
    %v226 = vld [vmem:[#allocation2 + $0x5e0] sm:$0xff]
    %v227 = vld [vmem:[#allocation2 + $0x5e8] sm:$0xff]
    %v228 = vld [vmem:[#allocation2 + $0x5f0] sm:$0xff]
    %v229 = vld [vmem:[#allocation2 + $0x5f8] sm:$0xff]
    %v230 = vld [vmem:[#allocation2 + $0x600] sm:$0xff]
    %v231 = vld [vmem:[#allocation2 + $0x608] sm:$0xff]
    %v232 = vld [vmem:[#allocation2 + $0x610] sm:$0xff]
    %v233 = vld [vmem:[#allocation2 + $0x618] sm:$0xff]
    %v234 = vld [vmem:[#allocation2 + $0x620] sm:$0xff]
    %v235 = vld [vmem:[#allocation2 + $0x628] sm:$0xff]
    %v236 = vld [vmem:[#allocation2 + $0x630] sm:$0xff]
    %v237 = vld [vmem:[#allocation2 + $0x638] sm:$0xff]
    %v238 = vld [vmem:[#allocation2 + $0x640] sm:$0xff]
    %v239 = vld [vmem:[#allocation2 + $0x648] sm:$0xff]
    %v240 = vld [vmem:[#allocation2 + $0x650] sm:$0xff]
    %v241 = vld [vmem:[#allocation2 + $0x658] sm:$0xff]
    %v242 = vld [vmem:[#allocation2 + $0x660] sm:$0xff]
    %v243 = vld [vmem:[#allocation2 + $0x668] sm:$0xff]
    %v244 = vld [vmem:[#allocation2 + $0x670] sm:$0xff]
    %v245 = vld [vmem:[#allocation2 + $0x678] sm:$0xff]
    %v246 = vld [vmem:[#allocation2 + $0x680] sm:$0xff]
    %v247 = vld [vmem:[#allocation2 + $0x688] sm:$0xff]
    %v248 = vld [vmem:[#allocation2 + $0x690] sm:$0xff]
    %v249 = vld [vmem:[#allocation2 + $0x698] sm:$0xff]
    %v250 = vld [vmem:[#allocation2 + $0x6a0] sm:$0xff]
    %v251 = vld [vmem:[#allocation2 + $0x6a8] sm:$0xff]
    %v252 = vld [vmem:[#allocation2 + $0x6b0] sm:$0xff]
    %v253 = vld [vmem:[#allocation2 + $0x6b8] sm:$0xff]
    %v254 = vld [vmem:[#allocation2 + $0x6c0] sm:$0xff]
    %v255 = vld [vmem:[#allocation2 + $0x6c8] sm:$0xff]
    %v256 = vld [vmem:[#allocation2 + $0x6d0] sm:$0xff]
    %v257 = vld [vmem:[#allocation2 + $0x6d8] sm:$0xff]
    %v258 = vld [vmem:[#allocation2 + $0x6e0] sm:$0xff]
    %v259 = vld [vmem:[#allocation2 + $0x6e8] sm:$0xff]
    %v260 = vld [vmem:[#allocation2 + $0x6f0] sm:$0xff]
    %v261 = vld [vmem:[#allocation2 + $0x6f8] sm:$0xff]
    %v262 = vld [vmem:[#allocation2 + $0x700] sm:$0xff]
    %v263 = vld [vmem:[#allocation2 + $0x708] sm:$0xff]
    %v264 = vld [vmem:[#allocation2 + $0x710] sm:$0xff]
    %v265 = vld [vmem:[#allocation2 + $0x718] sm:$0xff]
    %v266 = vld [vmem:[#allocation2 + $0x720] sm:$0xff]
    %v267 = vld [vmem:[#allocation2 + $0x728] sm:$0xff]
    %v268 = vld [vmem:[#allocation2 + $0x730] sm:$0xff]
    %v269 = vld [vmem:[#allocation2 + $0x738] sm:$0xff]
    %v270 = vld [vmem:[#allocation2 + $0x740] sm:$0xff]
    %v271 = vld [vmem:[#allocation2 + $0x748] sm:$0xff]
    %v272 = vld [vmem:[#allocation2 + $0x750] sm:$0xff]
    %v273 = vld [vmem:[#allocation2 + $0x758] sm:$0xff]
    %v274 = vld [vmem:[#allocation2 + $0x760] sm:$0xff]
    %v275 = vld [vmem:[#allocation2 + $0x768] sm:$0xff]
    %v276 = vld [vmem:[#allocation2 + $0x770] sm:$0xff]
    %v277 = vld [vmem:[#allocation2 + $0x778] sm:$0xff]
    %v278 = vld [vmem:[#allocation2 + $0x780] sm:$0xff]
    %v279 = vld [vmem:[#allocation2 + $0x788] sm:$0xff]
    %v280 = vld [vmem:[#allocation2 + $0x790] sm:$0xff]
    %v281 = vld [vmem:[#allocation2 + $0x798] sm:$0xff]
    %v282 = vld [vmem:[#allocation2 + $0x7a0] sm:$0xff]
    %v283 = vld [vmem:[#allocation2 + $0x7a8] sm:$0xff]
    %v284 = vld [vmem:[#allocation2 + $0x7b0] sm:$0xff]
    %v285 = vld [vmem:[#allocation2 + $0x7b8] sm:$0xff]
    %v286 = vld [vmem:[#allocation2 + $0x7c0] sm:$0xff]
    %v287 = vld [vmem:[#allocation2 + $0x7c8] sm:$0xff]
    %v288 = vld [vmem:[#allocation2 + $0x7d0] sm:$0xff]
    %v289 = vld [vmem:[#allocation2 + $0x7d8] sm:$0xff]
    %v290 = vld [vmem:[#allocation2 + $0x7e0] sm:$0xff]
    %v291 = vld [vmem:[#allocation2 + $0x7e8] sm:$0xff]
    %v292 = vld [vmem:[#allocation2 + $0x7f0] sm:$0xff]
    %v293 = vld [vmem:[#allocation2 + $0x7f8] sm:$0xff]
    %v294 = vld [vmem:[%s2] sm:$0xff]
    %v296 = vlaneseq
    %v297 = vshrl.u32 %v296, 7
    %v298 = vsub.s32 0, %v297
    %v299 = vrot.slane %v294, %v298
    %v300 = vlaneseq
    %v301 = vshrl.u32 %v300, 7
    %v302 = vsub.s32 1, %v301
    %v303 = vrot.slane %v294, %v302
    %v304 = vlaneseq
    %v305 = vshrl.u32 %v304, 7
    %v306 = vsub.s32 2, %v305
    %v307 = vrot.slane %v294, %v306
    %v308 = vlaneseq
    %v309 = vshrl.u32 %v308, 7
    %v310 = vsub.s32 3, %v309
    %v311 = vrot.slane %v294, %v310
    %v312 = vlaneseq
    %v313 = vshrl.u32 %v312, 7
    %v314 = vsub.s32 4, %v313
    %v315 = vrot.slane %v294, %v314
    %v316 = vlaneseq
    %v317 = vshrl.u32 %v316, 7
    %v318 = vsub.s32 5, %v317
    %v319 = vrot.slane %v294, %v318
    %v320 = vlaneseq
    %v321 = vshrl.u32 %v320, 7
    %v322 = vsub.s32 6, %v321
    %v323 = vrot.slane %v294, %v322
    %v324 = vlaneseq
    %v325 = vshrl.u32 %v324, 7
    %v326 = vsub.s32 7, %v325
    %v327 = vrot.slane %v294, %v326
    %v340 = vunpack.c.l.b16 %v34
    %v341 = vunpack.c.h.b16 %v34
    %v342 = vunpack.c.l.b16 %v35
    %v343 = vunpack.c.h.b16 %v35
    %v344 = vunpack.c.l.b16 %v36
    %v345 = vunpack.c.h.b16 %v36
    %v346 = vunpack.c.l.b16 %v37
    %v347 = vunpack.c.h.b16 %v37
    %v348 = vpack.c.b16 %v344, %v340
    %v349 = vpack.c.b16 %v345, %v341
    %v350 = vpack.c.b16 %v346, %v342
    %v351 = vpack.c.b16 %v347, %v343
    %v612 = vunpack.c.l.b16 %v38
    %v613 = vunpack.c.h.b16 %v38
    %v614 = vunpack.c.l.b16 %v39
    %v615 = vunpack.c.h.b16 %v39
    %v616 = vunpack.c.l.b16 %v40
    %v617 = vunpack.c.h.b16 %v40
    %v618 = vunpack.c.l.b16 %v41
    %v619 = vunpack.c.h.b16 %v41
    %v620 = vunpack.c.l.b16 %v42
    %v621 = vunpack.c.h.b16 %v42
    %v622 = vunpack.c.l.b16 %v43
    %v623 = vunpack.c.h.b16 %v43
    %v624 = vunpack.c.l.b16 %v44
    %v625 = vunpack.c.h.b16 %v44
    %v626 = vunpack.c.l.b16 %v45
    %v627 = vunpack.c.h.b16 %v45
    %v628 = vunpack.c.l.b16 %v46
    %v629 = vunpack.c.h.b16 %v46
    %v630 = vunpack.c.l.b16 %v47
    %v631 = vunpack.c.h.b16 %v47
    %v632 = vunpack.c.l.b16 %v48
    %v633 = vunpack.c.h.b16 %v48
    %v634 = vunpack.c.l.b16 %v49
    %v635 = vunpack.c.h.b16 %v49
    %v636 = vunpack.c.l.b16 %v50
    %v637 = vunpack.c.h.b16 %v50
    %v638 = vunpack.c.l.b16 %v51
    %v639 = vunpack.c.h.b16 %v51
    %v640 = vunpack.c.l.b16 %v52
    %v641 = vunpack.c.h.b16 %v52
    %v642 = vunpack.c.l.b16 %v53
    %v643 = vunpack.c.h.b16 %v53
    %v644 = vunpack.c.l.b16 %v54
    %v645 = vunpack.c.h.b16 %v54
    %v646 = vunpack.c.l.b16 %v55
    %v647 = vunpack.c.h.b16 %v55
    %v648 = vunpack.c.l.b16 %v56
    %v649 = vunpack.c.h.b16 %v56
    %v650 = vunpack.c.l.b16 %v57
    %v651 = vunpack.c.h.b16 %v57
    %v652 = vunpack.c.l.b16 %v58
    %v653 = vunpack.c.h.b16 %v58
    %v654 = vunpack.c.l.b16 %v59
    %v655 = vunpack.c.h.b16 %v59
    %v656 = vunpack.c.l.b16 %v60
    %v657 = vunpack.c.h.b16 %v60
    %v658 = vunpack.c.l.b16 %v61
    %v659 = vunpack.c.h.b16 %v61
    %v660 = vunpack.c.l.b16 %v62
    %v661 = vunpack.c.h.b16 %v62
    %v662 = vunpack.c.l.b16 %v63
    %v663 = vunpack.c.h.b16 %v63
    %v664 = vunpack.c.l.b16 %v64
    %v665 = vunpack.c.h.b16 %v64
    %v666 = vunpack.c.l.b16 %v65
    %v667 = vunpack.c.h.b16 %v65
    %v668 = vunpack.c.l.b16 %v66
    %v669 = vunpack.c.h.b16 %v66
    %v670 = vunpack.c.l.b16 %v67
    %v671 = vunpack.c.h.b16 %v67
    %v672 = vunpack.c.l.b16 %v68
    %v673 = vunpack.c.h.b16 %v68
    %v674 = vunpack.c.l.b16 %v69
    %v675 = vunpack.c.h.b16 %v69
    %v676 = vunpack.c.l.b16 %v70
    %v677 = vunpack.c.h.b16 %v70
    %v678 = vunpack.c.l.b16 %v71
    %v679 = vunpack.c.h.b16 %v71
    %v680 = vunpack.c.l.b16 %v72
    %v681 = vunpack.c.h.b16 %v72
    %v682 = vunpack.c.l.b16 %v73
    %v683 = vunpack.c.h.b16 %v73
    %v684 = vunpack.c.l.b16 %v74
    %v685 = vunpack.c.h.b16 %v74
    %v686 = vunpack.c.l.b16 %v75
    %v687 = vunpack.c.h.b16 %v75
    %v688 = vunpack.c.l.b16 %v76
    %v689 = vunpack.c.h.b16 %v76
    %v690 = vunpack.c.l.b16 %v77
    %v691 = vunpack.c.h.b16 %v77
    %v692 = vunpack.c.l.b16 %v78
    %v693 = vunpack.c.h.b16 %v78
    %v694 = vunpack.c.l.b16 %v79
    %v695 = vunpack.c.h.b16 %v79
    %v696 = vunpack.c.l.b16 %v80
    %v697 = vunpack.c.h.b16 %v80
    %v698 = vunpack.c.l.b16 %v81
    %v699 = vunpack.c.h.b16 %v81
    %v700 = vunpack.c.l.b16 %v82
    %v701 = vunpack.c.h.b16 %v82
    %v702 = vunpack.c.l.b16 %v83
    %v703 = vunpack.c.h.b16 %v83
    %v704 = vunpack.c.l.b16 %v84
    %v705 = vunpack.c.h.b16 %v84
    %v706 = vunpack.c.l.b16 %v85
    %v707 = vunpack.c.h.b16 %v85
    %v708 = vunpack.c.l.b16 %v86
    %v709 = vunpack.c.h.b16 %v86
    %v710 = vunpack.c.l.b16 %v87
    %v711 = vunpack.c.h.b16 %v87
    %v712 = vunpack.c.l.b16 %v88
    %v713 = vunpack.c.h.b16 %v88
    %v714 = vunpack.c.l.b16 %v89
    %v715 = vunpack.c.h.b16 %v89
    %v716 = vunpack.c.l.b16 %v90
    %v717 = vunpack.c.h.b16 %v90
    %v718 = vunpack.c.l.b16 %v91
    %v719 = vunpack.c.h.b16 %v91
    %v720 = vunpack.c.l.b16 %v92
    %v721 = vunpack.c.h.b16 %v92
    %v722 = vunpack.c.l.b16 %v93
    %v723 = vunpack.c.h.b16 %v93
    %v724 = vunpack.c.l.b16 %v94
    %v725 = vunpack.c.h.b16 %v94
    %v726 = vunpack.c.l.b16 %v95
    %v727 = vunpack.c.h.b16 %v95
    %v728 = vunpack.c.l.b16 %v96
    %v729 = vunpack.c.h.b16 %v96
    %v730 = vunpack.c.l.b16 %v97
    %v731 = vunpack.c.h.b16 %v97
    %v732 = vunpack.c.l.b16 %v98
    %v733 = vunpack.c.h.b16 %v98
    %v734 = vunpack.c.l.b16 %v99
    %v735 = vunpack.c.h.b16 %v99
    %v736 = vunpack.c.l.b16 %v100
    %v737 = vunpack.c.h.b16 %v100
    %v738 = vunpack.c.l.b16 %v101
    %v739 = vunpack.c.h.b16 %v101
    %v740 = vunpack.c.l.b16 %v102
    %v741 = vunpack.c.h.b16 %v102
    %v742 = vunpack.c.l.b16 %v103
    %v743 = vunpack.c.h.b16 %v103
    %v744 = vunpack.c.l.b16 %v104
    %v745 = vunpack.c.h.b16 %v104
    %v746 = vunpack.c.l.b16 %v105
    %v747 = vunpack.c.h.b16 %v105
    %v748 = vunpack.c.l.b16 %v106
    %v749 = vunpack.c.h.b16 %v106
    %v750 = vunpack.c.l.b16 %v107
    %v751 = vunpack.c.h.b16 %v107
    %v752 = vunpack.c.l.b16 %v108
    %v753 = vunpack.c.h.b16 %v108
    %v754 = vunpack.c.l.b16 %v109
    %v755 = vunpack.c.h.b16 %v109
    %v756 = vunpack.c.l.b16 %v110
    %v757 = vunpack.c.h.b16 %v110
    %v758 = vunpack.c.l.b16 %v111
    %v759 = vunpack.c.h.b16 %v111
    %v760 = vunpack.c.l.b16 %v112
    %v761 = vunpack.c.h.b16 %v112
    %v762 = vunpack.c.l.b16 %v113
    %v763 = vunpack.c.h.b16 %v113
    %v764 = vunpack.c.l.b16 %v114
    %v765 = vunpack.c.h.b16 %v114
    %v766 = vunpack.c.l.b16 %v115
    %v767 = vunpack.c.h.b16 %v115
    %v768 = vunpack.c.l.b16 %v116
    %v769 = vunpack.c.h.b16 %v116
    %v770 = vunpack.c.l.b16 %v117
    %v771 = vunpack.c.h.b16 %v117
    %v772 = vunpack.c.l.b16 %v118
    %v773 = vunpack.c.h.b16 %v118
    %v774 = vunpack.c.l.b16 %v119
    %v775 = vunpack.c.h.b16 %v119
    %v776 = vunpack.c.l.b16 %v120
    %v777 = vunpack.c.h.b16 %v120
    %v778 = vunpack.c.l.b16 %v121
    %v779 = vunpack.c.h.b16 %v121
    %v780 = vunpack.c.l.b16 %v122
    %v781 = vunpack.c.h.b16 %v122
    %v782 = vunpack.c.l.b16 %v123
    %v783 = vunpack.c.h.b16 %v123
    %v784 = vunpack.c.l.b16 %v124
    %v785 = vunpack.c.h.b16 %v124
    %v786 = vunpack.c.l.b16 %v125
    %v787 = vunpack.c.h.b16 %v125
    %v788 = vunpack.c.l.b16 %v126
    %v789 = vunpack.c.h.b16 %v126
    %v790 = vunpack.c.l.b16 %v127
    %v791 = vunpack.c.h.b16 %v127
    %v792 = vunpack.c.l.b16 %v128
    %v793 = vunpack.c.h.b16 %v128
    %v794 = vunpack.c.l.b16 %v129
    %v795 = vunpack.c.h.b16 %v129
    %v796 = vunpack.c.l.b16 %v130
    %v797 = vunpack.c.h.b16 %v130
    %v798 = vunpack.c.l.b16 %v131
    %v799 = vunpack.c.h.b16 %v131
    %v800 = vunpack.c.l.b16 %v132
    %v801 = vunpack.c.h.b16 %v132
    %v802 = vunpack.c.l.b16 %v133
    %v803 = vunpack.c.h.b16 %v133
    %v804 = vunpack.c.l.b16 %v134
    %v805 = vunpack.c.h.b16 %v134
    %v806 = vunpack.c.l.b16 %v135
    %v807 = vunpack.c.h.b16 %v135
    %v808 = vunpack.c.l.b16 %v136
    %v809 = vunpack.c.h.b16 %v136
    %v810 = vunpack.c.l.b16 %v137
    %v811 = vunpack.c.h.b16 %v137
    %v812 = vunpack.c.l.b16 %v138
    %v813 = vunpack.c.h.b16 %v138
    %v814 = vunpack.c.l.b16 %v139
    %v815 = vunpack.c.h.b16 %v139
    %v816 = vunpack.c.l.b16 %v140
    %v817 = vunpack.c.h.b16 %v140
    %v818 = vunpack.c.l.b16 %v141
    %v819 = vunpack.c.h.b16 %v141
    %v820 = vunpack.c.l.b16 %v142
    %v821 = vunpack.c.h.b16 %v142
    %v822 = vunpack.c.l.b16 %v143
    %v823 = vunpack.c.h.b16 %v143
    %v824 = vunpack.c.l.b16 %v144
    %v825 = vunpack.c.h.b16 %v144
    %v826 = vunpack.c.l.b16 %v145
    %v827 = vunpack.c.h.b16 %v145
    %v828 = vunpack.c.l.b16 %v146
    %v829 = vunpack.c.h.b16 %v146
    %v830 = vunpack.c.l.b16 %v147
    %v831 = vunpack.c.h.b16 %v147
    %v832 = vunpack.c.l.b16 %v148
    %v833 = vunpack.c.h.b16 %v148
    %v834 = vunpack.c.l.b16 %v149
    %v835 = vunpack.c.h.b16 %v149
    %v836 = vunpack.c.l.b16 %v150
    %v837 = vunpack.c.h.b16 %v150
    %v838 = vunpack.c.l.b16 %v151
    %v839 = vunpack.c.h.b16 %v151
    %v840 = vunpack.c.l.b16 %v152
    %v841 = vunpack.c.h.b16 %v152
    %v842 = vunpack.c.l.b16 %v153
    %v843 = vunpack.c.h.b16 %v153
    %v844 = vunpack.c.l.b16 %v154
    %v845 = vunpack.c.h.b16 %v154
    %v846 = vunpack.c.l.b16 %v155
    %v847 = vunpack.c.h.b16 %v155
    %v848 = vunpack.c.l.b16 %v156
    %v849 = vunpack.c.h.b16 %v156
    %v850 = vunpack.c.l.b16 %v157
    %v851 = vunpack.c.h.b16 %v157
    %v852 = vunpack.c.l.b16 %v158
    %v853 = vunpack.c.h.b16 %v158
    %v854 = vunpack.c.l.b16 %v159
    %v855 = vunpack.c.h.b16 %v159
    %v856 = vunpack.c.l.b16 %v160
    %v857 = vunpack.c.h.b16 %v160
    %v858 = vunpack.c.l.b16 %v161
    %v859 = vunpack.c.h.b16 %v161
    %v860 = vunpack.c.l.b16 %v162
    %v861 = vunpack.c.h.b16 %v162
    %v862 = vunpack.c.l.b16 %v163
    %v863 = vunpack.c.h.b16 %v163
    %v864 = vunpack.c.l.b16 %v164
    %v865 = vunpack.c.h.b16 %v164
    %v866 = vunpack.c.l.b16 %v165
    %v867 = vunpack.c.h.b16 %v165
    %v868 = vunpack.c.l.b16 %v166
    %v869 = vunpack.c.h.b16 %v166
    %v870 = vunpack.c.l.b16 %v167
    %v871 = vunpack.c.h.b16 %v167
    %v872 = vunpack.c.l.b16 %v168
    %v873 = vunpack.c.h.b16 %v168
    %v874 = vunpack.c.l.b16 %v169
    %v875 = vunpack.c.h.b16 %v169
    %v876 = vunpack.c.l.b16 %v170
    %v877 = vunpack.c.h.b16 %v170
    %v878 = vunpack.c.l.b16 %v171
    %v879 = vunpack.c.h.b16 %v171
    %v880 = vunpack.c.l.b16 %v172
    %v881 = vunpack.c.h.b16 %v172
    %v882 = vunpack.c.l.b16 %v173
    %v883 = vunpack.c.h.b16 %v173
    %v884 = vunpack.c.l.b16 %v174
    %v885 = vunpack.c.h.b16 %v174
    %v886 = vunpack.c.l.b16 %v175
    %v887 = vunpack.c.h.b16 %v175
    %v888 = vunpack.c.l.b16 %v176
    %v889 = vunpack.c.h.b16 %v176
    %v890 = vunpack.c.l.b16 %v177
    %v891 = vunpack.c.h.b16 %v177
    %v892 = vunpack.c.l.b16 %v178
    %v893 = vunpack.c.h.b16 %v178
    %v894 = vunpack.c.l.b16 %v179
    %v895 = vunpack.c.h.b16 %v179
    %v896 = vunpack.c.l.b16 %v180
    %v897 = vunpack.c.h.b16 %v180
    %v898 = vunpack.c.l.b16 %v181
    %v899 = vunpack.c.h.b16 %v181
    %v900 = vunpack.c.l.b16 %v182
    %v901 = vunpack.c.h.b16 %v182
    %v902 = vunpack.c.l.b16 %v183
    %v903 = vunpack.c.h.b16 %v183
    %v904 = vunpack.c.l.b16 %v184
    %v905 = vunpack.c.h.b16 %v184
    %v906 = vunpack.c.l.b16 %v185
    %v907 = vunpack.c.h.b16 %v185
    %v908 = vunpack.c.l.b16 %v186
    %v909 = vunpack.c.h.b16 %v186
    %v910 = vunpack.c.l.b16 %v187
    %v911 = vunpack.c.h.b16 %v187
    %v912 = vunpack.c.l.b16 %v188
    %v913 = vunpack.c.h.b16 %v188
    %v914 = vunpack.c.l.b16 %v189
    %v915 = vunpack.c.h.b16 %v189
    %v916 = vunpack.c.l.b16 %v190
    %v917 = vunpack.c.h.b16 %v190
    %v918 = vunpack.c.l.b16 %v191
    %v919 = vunpack.c.h.b16 %v191
    %v920 = vunpack.c.l.b16 %v192
    %v921 = vunpack.c.h.b16 %v192
    %v922 = vunpack.c.l.b16 %v193
    %v923 = vunpack.c.h.b16 %v193
    %v924 = vunpack.c.l.b16 %v194
    %v925 = vunpack.c.h.b16 %v194
    %v926 = vunpack.c.l.b16 %v195
    %v927 = vunpack.c.h.b16 %v195
    %v928 = vunpack.c.l.b16 %v196
    %v929 = vunpack.c.h.b16 %v196
    %v930 = vunpack.c.l.b16 %v197
    %v931 = vunpack.c.h.b16 %v197
    %v932 = vunpack.c.l.b16 %v198
    %v933 = vunpack.c.h.b16 %v198
    %v934 = vunpack.c.l.b16 %v199
    %v935 = vunpack.c.h.b16 %v199
    %v936 = vunpack.c.l.b16 %v200
    %v937 = vunpack.c.h.b16 %v200
    %v938 = vunpack.c.l.b16 %v201
    %v939 = vunpack.c.h.b16 %v201
    %v940 = vunpack.c.l.b16 %v202
    %v941 = vunpack.c.h.b16 %v202
    %v942 = vunpack.c.l.b16 %v203
    %v943 = vunpack.c.h.b16 %v203
    %v944 = vunpack.c.l.b16 %v204
    %v945 = vunpack.c.h.b16 %v204
    %v946 = vunpack.c.l.b16 %v205
    %v947 = vunpack.c.h.b16 %v205
    %v948 = vunpack.c.l.b16 %v206
    %v949 = vunpack.c.h.b16 %v206
    %v950 = vunpack.c.l.b16 %v207
    %v951 = vunpack.c.h.b16 %v207
    %v952 = vunpack.c.l.b16 %v208
    %v953 = vunpack.c.h.b16 %v208
    %v954 = vunpack.c.l.b16 %v209
    %v955 = vunpack.c.h.b16 %v209
    %v956 = vunpack.c.l.b16 %v210
    %v957 = vunpack.c.h.b16 %v210
    %v958 = vunpack.c.l.b16 %v211
    %v959 = vunpack.c.h.b16 %v211
    %v960 = vunpack.c.l.b16 %v212
    %v961 = vunpack.c.h.b16 %v212
    %v962 = vunpack.c.l.b16 %v213
    %v963 = vunpack.c.h.b16 %v213
    %v964 = vunpack.c.l.b16 %v214
    %v965 = vunpack.c.h.b16 %v214
    %v966 = vunpack.c.l.b16 %v215
    %v967 = vunpack.c.h.b16 %v215
    %v968 = vunpack.c.l.b16 %v216
    %v969 = vunpack.c.h.b16 %v216
    %v970 = vunpack.c.l.b16 %v217
    %v971 = vunpack.c.h.b16 %v217
    %v972 = vunpack.c.l.b16 %v218
    %v973 = vunpack.c.h.b16 %v218
    %v974 = vunpack.c.l.b16 %v219
    %v975 = vunpack.c.h.b16 %v219
    %v976 = vunpack.c.l.b16 %v220
    %v977 = vunpack.c.h.b16 %v220
    %v978 = vunpack.c.l.b16 %v221
    %v979 = vunpack.c.h.b16 %v221
    %v980 = vunpack.c.l.b16 %v222
    %v981 = vunpack.c.h.b16 %v222
    %v982 = vunpack.c.l.b16 %v223
    %v983 = vunpack.c.h.b16 %v223
    %v984 = vunpack.c.l.b16 %v224
    %v985 = vunpack.c.h.b16 %v224
    %v986 = vunpack.c.l.b16 %v225
    %v987 = vunpack.c.h.b16 %v225
    %v988 = vunpack.c.l.b16 %v226
    %v989 = vunpack.c.h.b16 %v226
    %v990 = vunpack.c.l.b16 %v227
    %v991 = vunpack.c.h.b16 %v227
    %v992 = vunpack.c.l.b16 %v228
    %v993 = vunpack.c.h.b16 %v228
    %v994 = vunpack.c.l.b16 %v229
    %v995 = vunpack.c.h.b16 %v229
    %v996 = vunpack.c.l.b16 %v230
    %v997 = vunpack.c.h.b16 %v230
    %v998 = vunpack.c.l.b16 %v231
    %v999 = vunpack.c.h.b16 %v231
    %v1000 = vunpack.c.l.b16 %v232
    %v1001 = vunpack.c.h.b16 %v232
    %v1002 = vunpack.c.l.b16 %v233
    %v1003 = vunpack.c.h.b16 %v233
    %v1004 = vunpack.c.l.b16 %v234
    %v1005 = vunpack.c.h.b16 %v234
    %v1006 = vunpack.c.l.b16 %v235
    %v1007 = vunpack.c.h.b16 %v235
    %v1008 = vunpack.c.l.b16 %v236
    %v1009 = vunpack.c.h.b16 %v236
    %v1010 = vunpack.c.l.b16 %v237
    %v1011 = vunpack.c.h.b16 %v237
    %v1012 = vunpack.c.l.b16 %v238
    %v1013 = vunpack.c.h.b16 %v238
    %v1014 = vunpack.c.l.b16 %v239
    %v1015 = vunpack.c.h.b16 %v239
    %v1016 = vunpack.c.l.b16 %v240
    %v1017 = vunpack.c.h.b16 %v240
    %v1018 = vunpack.c.l.b16 %v241
    %v1019 = vunpack.c.h.b16 %v241
    %v1020 = vunpack.c.l.b16 %v242
    %v1021 = vunpack.c.h.b16 %v242
    %v1022 = vunpack.c.l.b16 %v243
    %v1023 = vunpack.c.h.b16 %v243
    %v1024 = vunpack.c.l.b16 %v244
    %v1025 = vunpack.c.h.b16 %v244
    %v1026 = vunpack.c.l.b16 %v245
    %v1027 = vunpack.c.h.b16 %v245
    %v1028 = vunpack.c.l.b16 %v246
    %v1029 = vunpack.c.h.b16 %v246
    %v1030 = vunpack.c.l.b16 %v247
    %v1031 = vunpack.c.h.b16 %v247
    %v1032 = vunpack.c.l.b16 %v248
    %v1033 = vunpack.c.h.b16 %v248
    %v1034 = vunpack.c.l.b16 %v249
    %v1035 = vunpack.c.h.b16 %v249
    %v1036 = vunpack.c.l.b16 %v250
    %v1037 = vunpack.c.h.b16 %v250
    %v1038 = vunpack.c.l.b16 %v251
    %v1039 = vunpack.c.h.b16 %v251
    %v1040 = vunpack.c.l.b16 %v252
    %v1041 = vunpack.c.h.b16 %v252
    %v1042 = vunpack.c.l.b16 %v253
    %v1043 = vunpack.c.h.b16 %v253
    %v1044 = vunpack.c.l.b16 %v254
    %v1045 = vunpack.c.h.b16 %v254
    %v1046 = vunpack.c.l.b16 %v255
    %v1047 = vunpack.c.h.b16 %v255
    %v1048 = vunpack.c.l.b16 %v256
    %v1049 = vunpack.c.h.b16 %v256
    %v1050 = vunpack.c.l.b16 %v257
    %v1051 = vunpack.c.h.b16 %v257
    %v1052 = vunpack.c.l.b16 %v258
    %v1053 = vunpack.c.h.b16 %v258
    %v1054 = vunpack.c.l.b16 %v259
    %v1055 = vunpack.c.h.b16 %v259
    %v1056 = vunpack.c.l.b16 %v260
    %v1057 = vunpack.c.h.b16 %v260
    %v1058 = vunpack.c.l.b16 %v261
    %v1059 = vunpack.c.h.b16 %v261
    %v1060 = vunpack.c.l.b16 %v262
    %v1061 = vunpack.c.h.b16 %v262
    %v1062 = vunpack.c.l.b16 %v263
    %v1063 = vunpack.c.h.b16 %v263
    %v1064 = vunpack.c.l.b16 %v264
    %v1065 = vunpack.c.h.b16 %v264
    %v1066 = vunpack.c.l.b16 %v265
    %v1067 = vunpack.c.h.b16 %v265
    %v1068 = vunpack.c.l.b16 %v266
    %v1069 = vunpack.c.h.b16 %v266
    %v1070 = vunpack.c.l.b16 %v267
    %v1071 = vunpack.c.h.b16 %v267
    %v1072 = vunpack.c.l.b16 %v268
    %v1073 = vunpack.c.h.b16 %v268
    %v1074 = vunpack.c.l.b16 %v269
    %v1075 = vunpack.c.h.b16 %v269
    %v1076 = vunpack.c.l.b16 %v270
    %v1077 = vunpack.c.h.b16 %v270
    %v1078 = vunpack.c.l.b16 %v271
    %v1079 = vunpack.c.h.b16 %v271
    %v1080 = vunpack.c.l.b16 %v272
    %v1081 = vunpack.c.h.b16 %v272
    %v1082 = vunpack.c.l.b16 %v273
    %v1083 = vunpack.c.h.b16 %v273
    %v1084 = vunpack.c.l.b16 %v274
    %v1085 = vunpack.c.h.b16 %v274
    %v1086 = vunpack.c.l.b16 %v275
    %v1087 = vunpack.c.h.b16 %v275
    %v1088 = vunpack.c.l.b16 %v276
    %v1089 = vunpack.c.h.b16 %v276
    %v1090 = vunpack.c.l.b16 %v277
    %v1091 = vunpack.c.h.b16 %v277
    %v1092 = vunpack.c.l.b16 %v278
    %v1093 = vunpack.c.h.b16 %v278
    %v1094 = vunpack.c.l.b16 %v279
    %v1095 = vunpack.c.h.b16 %v279
    %v1096 = vunpack.c.l.b16 %v280
    %v1097 = vunpack.c.h.b16 %v280
    %v1098 = vunpack.c.l.b16 %v281
    %v1099 = vunpack.c.h.b16 %v281
    %v1100 = vunpack.c.l.b16 %v282
    %v1101 = vunpack.c.h.b16 %v282
    %v1102 = vunpack.c.l.b16 %v283
    %v1103 = vunpack.c.h.b16 %v283
    %v1104 = vunpack.c.l.b16 %v284
    %v1105 = vunpack.c.h.b16 %v284
    %v1106 = vunpack.c.l.b16 %v285
    %v1107 = vunpack.c.h.b16 %v285
    %v1108 = vunpack.c.l.b16 %v286
    %v1109 = vunpack.c.h.b16 %v286
    %v1110 = vunpack.c.l.b16 %v287
    %v1111 = vunpack.c.h.b16 %v287
    %v1112 = vunpack.c.l.b16 %v288
    %v1113 = vunpack.c.h.b16 %v288
    %v1114 = vunpack.c.l.b16 %v289
    %v1115 = vunpack.c.h.b16 %v289
    %v1116 = vunpack.c.l.b16 %v290
    %v1117 = vunpack.c.h.b16 %v290
    %v1118 = vunpack.c.l.b16 %v291
    %v1119 = vunpack.c.h.b16 %v291
    %v1120 = vunpack.c.l.b16 %v292
    %v1121 = vunpack.c.h.b16 %v292
    %v1122 = vunpack.c.l.b16 %v293
    %v1123 = vunpack.c.h.b16 %v293
    %v1124 = vpack.c.b16 %v620, %v612
    %v1125 = vpack.c.b16 %v621, %v613
    %v1126 = vpack.c.b16 %v622, %v614
    %v1127 = vpack.c.b16 %v623, %v615
    %v1128 = vpack.c.b16 %v624, %v616
    %v1129 = vpack.c.b16 %v625, %v617
    %v1130 = vpack.c.b16 %v626, %v618
    %v1131 = vpack.c.b16 %v627, %v619
    %v1132 = vpack.c.b16 %v636, %v628
    %v1133 = vpack.c.b16 %v637, %v629
    %v1134 = vpack.c.b16 %v638, %v630
    %v1135 = vpack.c.b16 %v639, %v631
    %v1136 = vpack.c.b16 %v640, %v632
    %v1137 = vpack.c.b16 %v641, %v633
    %v1138 = vpack.c.b16 %v642, %v634
    %v1139 = vpack.c.b16 %v643, %v635
    %v1140 = vpack.c.b16 %v652, %v644
    %v1141 = vpack.c.b16 %v653, %v645
    %v1142 = vpack.c.b16 %v654, %v646
    %v1143 = vpack.c.b16 %v655, %v647
    %v1144 = vpack.c.b16 %v656, %v648
    %v1145 = vpack.c.b16 %v657, %v649
    %v1146 = vpack.c.b16 %v658, %v650
    %v1147 = vpack.c.b16 %v659, %v651
    %v1148 = vpack.c.b16 %v668, %v660
    %v1149 = vpack.c.b16 %v669, %v661
    %v1150 = vpack.c.b16 %v670, %v662
    %v1151 = vpack.c.b16 %v671, %v663
    %v1152 = vpack.c.b16 %v672, %v664
    %v1153 = vpack.c.b16 %v673, %v665
    %v1154 = vpack.c.b16 %v674, %v666
    %v1155 = vpack.c.b16 %v675, %v667
    %v1156 = vpack.c.b16 %v684, %v676
    %v1157 = vpack.c.b16 %v685, %v677
    %v1158 = vpack.c.b16 %v686, %v678
    %v1159 = vpack.c.b16 %v687, %v679
    %v1160 = vpack.c.b16 %v688, %v680
    %v1161 = vpack.c.b16 %v689, %v681
    %v1162 = vpack.c.b16 %v690, %v682
    %v1163 = vpack.c.b16 %v691, %v683
    %v1164 = vpack.c.b16 %v700, %v692
    %v1165 = vpack.c.b16 %v701, %v693
    %v1166 = vpack.c.b16 %v702, %v694
    %v1167 = vpack.c.b16 %v703, %v695
    %v1168 = vpack.c.b16 %v704, %v696
    %v1169 = vpack.c.b16 %v705, %v697
    %v1170 = vpack.c.b16 %v706, %v698
    %v1171 = vpack.c.b16 %v707, %v699
    %v1172 = vpack.c.b16 %v716, %v708
    %v1173 = vpack.c.b16 %v717, %v709
    %v1174 = vpack.c.b16 %v718, %v710
    %v1175 = vpack.c.b16 %v719, %v711
    %v1176 = vpack.c.b16 %v720, %v712
    %v1177 = vpack.c.b16 %v721, %v713
    %v1178 = vpack.c.b16 %v722, %v714
    %v1179 = vpack.c.b16 %v723, %v715
    %v1180 = vpack.c.b16 %v732, %v724
    %v1181 = vpack.c.b16 %v733, %v725
    %v1182 = vpack.c.b16 %v734, %v726
    %v1183 = vpack.c.b16 %v735, %v727
    %v1184 = vpack.c.b16 %v736, %v728
    %v1185 = vpack.c.b16 %v737, %v729
    %v1186 = vpack.c.b16 %v738, %v730
    %v1187 = vpack.c.b16 %v739, %v731
    %v1188 = vpack.c.b16 %v748, %v740
    %v1189 = vpack.c.b16 %v749, %v741
    %v1190 = vpack.c.b16 %v750, %v742
    %v1191 = vpack.c.b16 %v751, %v743
    %v1192 = vpack.c.b16 %v752, %v744
    %v1193 = vpack.c.b16 %v753, %v745
    %v1194 = vpack.c.b16 %v754, %v746
    %v1195 = vpack.c.b16 %v755, %v747
    %v1196 = vpack.c.b16 %v764, %v756
    %v1197 = vpack.c.b16 %v765, %v757
    %v1198 = vpack.c.b16 %v766, %v758
    %v1199 = vpack.c.b16 %v767, %v759
    %v1200 = vpack.c.b16 %v768, %v760
    %v1201 = vpack.c.b16 %v769, %v761
    %v1202 = vpack.c.b16 %v770, %v762
    %v1203 = vpack.c.b16 %v771, %v763
    %v1204 = vpack.c.b16 %v780, %v772
    %v1205 = vpack.c.b16 %v781, %v773
    %v1206 = vpack.c.b16 %v782, %v774
    %v1207 = vpack.c.b16 %v783, %v775
    %v1208 = vpack.c.b16 %v784, %v776
    %v1209 = vpack.c.b16 %v785, %v777
    %v1210 = vpack.c.b16 %v786, %v778
    %v1211 = vpack.c.b16 %v787, %v779
    %v1212 = vpack.c.b16 %v796, %v788
    %v1213 = vpack.c.b16 %v797, %v789
    %v1214 = vpack.c.b16 %v798, %v790
    %v1215 = vpack.c.b16 %v799, %v791
    %v1216 = vpack.c.b16 %v800, %v792
    %v1217 = vpack.c.b16 %v801, %v793
    %v1218 = vpack.c.b16 %v802, %v794
    %v1219 = vpack.c.b16 %v803, %v795
    %v1220 = vpack.c.b16 %v812, %v804
    %v1221 = vpack.c.b16 %v813, %v805
    %v1222 = vpack.c.b16 %v814, %v806
    %v1223 = vpack.c.b16 %v815, %v807
    %v1224 = vpack.c.b16 %v816, %v808
    %v1225 = vpack.c.b16 %v817, %v809
    %v1226 = vpack.c.b16 %v818, %v810
    %v1227 = vpack.c.b16 %v819, %v811
    %v1228 = vpack.c.b16 %v828, %v820
    %v1229 = vpack.c.b16 %v829, %v821
    %v1230 = vpack.c.b16 %v830, %v822
    %v1231 = vpack.c.b16 %v831, %v823
    %v1232 = vpack.c.b16 %v832, %v824
    %v1233 = vpack.c.b16 %v833, %v825
    %v1234 = vpack.c.b16 %v834, %v826
    %v1235 = vpack.c.b16 %v835, %v827
    %v1236 = vpack.c.b16 %v844, %v836
    %v1237 = vpack.c.b16 %v845, %v837
    %v1238 = vpack.c.b16 %v846, %v838
    %v1239 = vpack.c.b16 %v847, %v839
    %v1240 = vpack.c.b16 %v848, %v840
    %v1241 = vpack.c.b16 %v849, %v841
    %v1242 = vpack.c.b16 %v850, %v842
    %v1243 = vpack.c.b16 %v851, %v843
    %v1244 = vpack.c.b16 %v860, %v852
    %v1245 = vpack.c.b16 %v861, %v853
    %v1246 = vpack.c.b16 %v862, %v854
    %v1247 = vpack.c.b16 %v863, %v855
    %v1248 = vpack.c.b16 %v864, %v856
    %v1249 = vpack.c.b16 %v865, %v857
    %v1250 = vpack.c.b16 %v866, %v858
    %v1251 = vpack.c.b16 %v867, %v859
    %v1252 = vpack.c.b16 %v876, %v868
    %v1253 = vpack.c.b16 %v877, %v869
    %v1254 = vpack.c.b16 %v878, %v870
    %v1255 = vpack.c.b16 %v879, %v871
    %v1256 = vpack.c.b16 %v880, %v872
    %v1257 = vpack.c.b16 %v881, %v873
    %v1258 = vpack.c.b16 %v882, %v874
    %v1259 = vpack.c.b16 %v883, %v875
    %v1260 = vpack.c.b16 %v892, %v884
    %v1261 = vpack.c.b16 %v893, %v885
    %v1262 = vpack.c.b16 %v894, %v886
    %v1263 = vpack.c.b16 %v895, %v887
    %v1264 = vpack.c.b16 %v896, %v888
    %v1265 = vpack.c.b16 %v897, %v889
    %v1266 = vpack.c.b16 %v898, %v890
    %v1267 = vpack.c.b16 %v899, %v891
    %v1268 = vpack.c.b16 %v908, %v900
    %v1269 = vpack.c.b16 %v909, %v901
    %v1270 = vpack.c.b16 %v910, %v902
    %v1271 = vpack.c.b16 %v911, %v903
    %v1272 = vpack.c.b16 %v912, %v904
    %v1273 = vpack.c.b16 %v913, %v905
    %v1274 = vpack.c.b16 %v914, %v906
    %v1275 = vpack.c.b16 %v915, %v907
    %v1276 = vpack.c.b16 %v924, %v916
    %v1277 = vpack.c.b16 %v925, %v917
    %v1278 = vpack.c.b16 %v926, %v918
    %v1279 = vpack.c.b16 %v927, %v919
    %v1280 = vpack.c.b16 %v928, %v920
    %v1281 = vpack.c.b16 %v929, %v921
    %v1282 = vpack.c.b16 %v930, %v922
    %v1283 = vpack.c.b16 %v931, %v923
    %v1284 = vpack.c.b16 %v940, %v932
    %v1285 = vpack.c.b16 %v941, %v933
    %v1286 = vpack.c.b16 %v942, %v934
    %v1287 = vpack.c.b16 %v943, %v935
    %v1288 = vpack.c.b16 %v944, %v936
    %v1289 = vpack.c.b16 %v945, %v937
    %v1290 = vpack.c.b16 %v946, %v938
    %v1291 = vpack.c.b16 %v947, %v939
    %v1292 = vpack.c.b16 %v956, %v948
    %v1293 = vpack.c.b16 %v957, %v949
    %v1294 = vpack.c.b16 %v958, %v950
    %v1295 = vpack.c.b16 %v959, %v951
    %v1296 = vpack.c.b16 %v960, %v952
    %v1297 = vpack.c.b16 %v961, %v953
    %v1298 = vpack.c.b16 %v962, %v954
    %v1299 = vpack.c.b16 %v963, %v955
    %v1300 = vpack.c.b16 %v972, %v964
    %v1301 = vpack.c.b16 %v973, %v965
    %v1302 = vpack.c.b16 %v974, %v966
    %v1303 = vpack.c.b16 %v975, %v967
    %v1304 = vpack.c.b16 %v976, %v968
    %v1305 = vpack.c.b16 %v977, %v969
    %v1306 = vpack.c.b16 %v978, %v970
    %v1307 = vpack.c.b16 %v979, %v971
    %v1308 = vpack.c.b16 %v988, %v980
    %v1309 = vpack.c.b16 %v989, %v981
    %v1310 = vpack.c.b16 %v990, %v982
    %v1311 = vpack.c.b16 %v991, %v983
    %v1312 = vpack.c.b16 %v992, %v984
    %v1313 = vpack.c.b16 %v993, %v985
    %v1314 = vpack.c.b16 %v994, %v986
    %v1315 = vpack.c.b16 %v995, %v987
    %v1316 = vpack.c.b16 %v1004, %v996
    %v1317 = vpack.c.b16 %v1005, %v997
    %v1318 = vpack.c.b16 %v1006, %v998
    %v1319 = vpack.c.b16 %v1007, %v999
    %v1320 = vpack.c.b16 %v1008, %v1000
    %v1321 = vpack.c.b16 %v1009, %v1001
    %v1322 = vpack.c.b16 %v1010, %v1002
    %v1323 = vpack.c.b16 %v1011, %v1003
    %v1324 = vpack.c.b16 %v1020, %v1012
    %v1325 = vpack.c.b16 %v1021, %v1013
    %v1326 = vpack.c.b16 %v1022, %v1014
    %v1327 = vpack.c.b16 %v1023, %v1015
    %v1328 = vpack.c.b16 %v1024, %v1016
    %v1329 = vpack.c.b16 %v1025, %v1017
    %v1330 = vpack.c.b16 %v1026, %v1018
    %v1331 = vpack.c.b16 %v1027, %v1019
    %v1332 = vpack.c.b16 %v1036, %v1028
    %v1333 = vpack.c.b16 %v1037, %v1029
    %v1334 = vpack.c.b16 %v1038, %v1030
    %v1335 = vpack.c.b16 %v1039, %v1031
    %v1336 = vpack.c.b16 %v1040, %v1032
    %v1337 = vpack.c.b16 %v1041, %v1033
    %v1338 = vpack.c.b16 %v1042, %v1034
    %v1339 = vpack.c.b16 %v1043, %v1035
    %v1340 = vpack.c.b16 %v1052, %v1044
    %v1341 = vpack.c.b16 %v1053, %v1045
    %v1342 = vpack.c.b16 %v1054, %v1046
    %v1343 = vpack.c.b16 %v1055, %v1047
    %v1344 = vpack.c.b16 %v1056, %v1048
    %v1345 = vpack.c.b16 %v1057, %v1049
    %v1346 = vpack.c.b16 %v1058, %v1050
    %v1347 = vpack.c.b16 %v1059, %v1051
    %v1348 = vpack.c.b16 %v1068, %v1060
    %v1349 = vpack.c.b16 %v1069, %v1061
    %v1350 = vpack.c.b16 %v1070, %v1062
    %v1351 = vpack.c.b16 %v1071, %v1063
    %v1352 = vpack.c.b16 %v1072, %v1064
    %v1353 = vpack.c.b16 %v1073, %v1065
    %v1354 = vpack.c.b16 %v1074, %v1066
    %v1355 = vpack.c.b16 %v1075, %v1067
    %v1356 = vpack.c.b16 %v1084, %v1076
    %v1357 = vpack.c.b16 %v1085, %v1077
    %v1358 = vpack.c.b16 %v1086, %v1078
    %v1359 = vpack.c.b16 %v1087, %v1079
    %v1360 = vpack.c.b16 %v1088, %v1080
    %v1361 = vpack.c.b16 %v1089, %v1081
    %v1362 = vpack.c.b16 %v1090, %v1082
    %v1363 = vpack.c.b16 %v1091, %v1083
    %v1364 = vpack.c.b16 %v1100, %v1092
    %v1365 = vpack.c.b16 %v1101, %v1093
    %v1366 = vpack.c.b16 %v1102, %v1094
    %v1367 = vpack.c.b16 %v1103, %v1095
    %v1368 = vpack.c.b16 %v1104, %v1096
    %v1369 = vpack.c.b16 %v1105, %v1097
    %v1370 = vpack.c.b16 %v1106, %v1098
    %v1371 = vpack.c.b16 %v1107, %v1099
    %v1372 = vpack.c.b16 %v1116, %v1108
    %v1373 = vpack.c.b16 %v1117, %v1109
    %v1374 = vpack.c.b16 %v1118, %v1110
    %v1375 = vpack.c.b16 %v1119, %v1111
    %v1376 = vpack.c.b16 %v1120, %v1112
    %v1377 = vpack.c.b16 %v1121, %v1113
    %v1378 = vpack.c.b16 %v1122, %v1114
    %v1379 = vpack.c.b16 %v1123, %v1115
    %1636 = vmatprep.subr.bf16.mxu0 %v1125
    %1637 = vmatpush1.bf16.msra.mxu0 %v1124
    %1638 = vmatprep.subr.bf16.mxu0 %v1133
    %1639 = vmatpush1.bf16.msra.mxu0 %v1132
    %1640 = vmatprep.subr.bf16.mxu0 %v1141
    %1641 = vmatpush1.bf16.msra.mxu0 %v1140
    %1642 = vmatprep.subr.bf16.mxu0 %v1149
    %1643 = vmatpush1.bf16.msra.mxu0 %v1148
    %1644 = vmatprep.subr.bf16.mxu0 %v1157
    %1645 = vmatpush1.bf16.msra.mxu0 %v1156
    %1646 = vmatprep.subr.bf16.mxu0 %v1165
    %1647 = vmatpush1.bf16.msra.mxu0 %v1164
    %1648 = vmatprep.subr.bf16.mxu0 %v1173
    %1649 = vmatpush1.bf16.msra.mxu0 %v1172
    %1650 = vmatprep.subr.bf16.mxu0 %v1181
    %1651 = vmatpush1.bf16.msra.mxu0 %v1180
    %1652 = vmatprep.subr.bf16.mxu0 %v1189
    %1653 = vmatpush1.bf16.msra.mxu0 %v1188
    %1654 = vmatprep.subr.bf16.mxu0 %v1197
    %1655 = vmatpush1.bf16.msra.mxu0 %v1196
    %1656 = vmatprep.subr.bf16.mxu0 %v1205
    %1657 = vmatpush1.bf16.msra.mxu0 %v1204
    %1658 = vmatprep.subr.bf16.mxu0 %v1213
    %1659 = vmatpush1.bf16.msra.mxu0 %v1212
    %1660 = vmatprep.subr.bf16.mxu0 %v1221
    %1661 = vmatpush1.bf16.msra.mxu0 %v1220
    %1662 = vmatprep.subr.bf16.mxu0 %v1229
    %1663 = vmatpush1.bf16.msra.mxu0 %v1228
    %1664 = vmatprep.subr.bf16.mxu0 %v1237
    %1665 = vmatpush1.bf16.msra.mxu0 %v1236
    %1666 = vmatprep.subr.bf16.mxu0 %v1245
    %1667 = vmatpush1.bf16.msra.mxu0 %v1244
    %1668 = vmatprep.mubr.bf16.mxu0 %v349
    %1669 = vmatmul.mubr.bf16.gmra.mrb[0].mxu0 %v348
    %v1670 = vpop.f32.mrb[0].mxu0
    %v1671 = vadd.f32 %v299, %v1670
    %v1672 = vpop.f32.mrb[0].mxu0
    %v1673 = vadd.f32 %v303, %v1672
    %v1674 = vpop.f32.mrb[0].mxu0
    %v1675 = vadd.f32 %v299, %v1674
    %v1676 = vpop.f32.mrb[0].mxu0
    %v1677 = vadd.f32 %v303, %v1676
    %1678 = vdwg.mxu0
    %1679 = vmatprep.subr.bf16.mxu0 %v1253
    %1680 = vmatpush1.bf16.msra.mxu0 %v1252
    %1681 = vmatprep.subr.bf16.mxu0 %v1261
    %1682 = vmatpush1.bf16.msra.mxu0 %v1260
    %1683 = vmatprep.subr.bf16.mxu0 %v1269
    %1684 = vmatpush1.bf16.msra.mxu0 %v1268
    %1685 = vmatprep.subr.bf16.mxu0 %v1277
    %1686 = vmatpush1.bf16.msra.mxu0 %v1276
    %1687 = vmatprep.subr.bf16.mxu0 %v1285
    %1688 = vmatpush1.bf16.msra.mxu0 %v1284
    %1689 = vmatprep.subr.bf16.mxu0 %v1293
    %1690 = vmatpush1.bf16.msra.mxu0 %v1292
    %1691 = vmatprep.subr.bf16.mxu0 %v1301
    %1692 = vmatpush1.bf16.msra.mxu0 %v1300
    %1693 = vmatprep.subr.bf16.mxu0 %v1309
    %1694 = vmatpush1.bf16.msra.mxu0 %v1308
    %1695 = vmatprep.subr.bf16.mxu0 %v1317
    %1696 = vmatpush1.bf16.msra.mxu0 %v1316
    %1697 = vmatprep.subr.bf16.mxu0 %v1325
    %1698 = vmatpush1.bf16.msra.mxu0 %v1324
    %1699 = vmatprep.subr.bf16.mxu0 %v1333
    %1700 = vmatpush1.bf16.msra.mxu0 %v1332
    %1701 = vmatprep.subr.bf16.mxu0 %v1341
    %1702 = vmatpush1.bf16.msra.mxu0 %v1340
    %1703 = vmatprep.subr.bf16.mxu0 %v1349
    %1704 = vmatpush1.bf16.msra.mxu0 %v1348
    %1705 = vmatprep.subr.bf16.mxu0 %v1357
    %1706 = vmatpush1.bf16.msra.mxu0 %v1356
    %1707 = vmatprep.subr.bf16.mxu0 %v1365
    %1708 = vmatpush1.bf16.msra.mxu0 %v1364
    %1709 = vmatprep.subr.bf16.mxu0 %v1373
    %1710 = vmatpush1.bf16.msra.mxu0 %v1372
    %1711 = vmatprep.mubr.bf16.mxu0 %v351
    %1712 = vmatmul.mubr.bf16.gmra.mrb[0].mxu0 %v350
    %v1713 = vpop.f32.mrb[0].mxu0
    %v1714 = vadd.f32 %v1671, %v1713
    %v1715 = vpop.f32.mrb[0].mxu0
    %v1716 = vadd.f32 %v1673, %v1715
    %v1717 = vpop.f32.mrb[0].mxu0
    %v1718 = vadd.f32 %v1675, %v1717
    %v1719 = vpop.f32.mrb[0].mxu0
    %v1720 = vadd.f32 %v1677, %v1719
    %1721 = vdwg.mxu0
    %1722 = vmatprep.subr.bf16.mxu0 %v1127
    %1723 = vmatpush1.bf16.msra.mxu0 %v1126
    %1724 = vmatprep.subr.bf16.mxu0 %v1135
    %1725 = vmatpush1.bf16.msra.mxu0 %v1134
    %1726 = vmatprep.subr.bf16.mxu0 %v1143
    %1727 = vmatpush1.bf16.msra.mxu0 %v1142
    %1728 = vmatprep.subr.bf16.mxu0 %v1151
    %1729 = vmatpush1.bf16.msra.mxu0 %v1150
    %1730 = vmatprep.subr.bf16.mxu0 %v1159
    %1731 = vmatpush1.bf16.msra.mxu0 %v1158
    %1732 = vmatprep.subr.bf16.mxu0 %v1167
    %1733 = vmatpush1.bf16.msra.mxu0 %v1166
    %1734 = vmatprep.subr.bf16.mxu0 %v1175
    %1735 = vmatpush1.bf16.msra.mxu0 %v1174
    %1736 = vmatprep.subr.bf16.mxu0 %v1183
    %1737 = vmatpush1.bf16.msra.mxu0 %v1182
    %1738 = vmatprep.subr.bf16.mxu0 %v1191
    %1739 = vmatpush1.bf16.msra.mxu0 %v1190
    %1740 = vmatprep.subr.bf16.mxu0 %v1199
    %1741 = vmatpush1.bf16.msra.mxu0 %v1198
    %1742 = vmatprep.subr.bf16.mxu0 %v1207
    %1743 = vmatpush1.bf16.msra.mxu0 %v1206
    %1744 = vmatprep.subr.bf16.mxu0 %v1215
    %1745 = vmatpush1.bf16.msra.mxu0 %v1214
    %1746 = vmatprep.subr.bf16.mxu0 %v1223
    %1747 = vmatpush1.bf16.msra.mxu0 %v1222
    %1748 = vmatprep.subr.bf16.mxu0 %v1231
    %1749 = vmatpush1.bf16.msra.mxu0 %v1230
    %1750 = vmatprep.subr.bf16.mxu0 %v1239
    %1751 = vmatpush1.bf16.msra.mxu0 %v1238
    %1752 = vmatprep.subr.bf16.mxu0 %v1247
    %1753 = vmatpush1.bf16.msra.mxu0 %v1246
    %1754 = vmatprep.mubr.bf16.mxu0 %v349
    %1755 = vmatmul.mubr.bf16.gmra.mrb[0].mxu0 %v348
    %v1756 = vpop.f32.mrb[0].mxu0
    %v1757 = vadd.f32 %v307, %v1756
    %v1758 = vpop.f32.mrb[0].mxu0
    %v1759 = vadd.f32 %v311, %v1758
    %v1760 = vpop.f32.mrb[0].mxu0
    %v1761 = vadd.f32 %v307, %v1760
    %v1762 = vpop.f32.mrb[0].mxu0
    %v1763 = vadd.f32 %v311, %v1762
    %1764 = vdwg.mxu0
    %1765 = vmatprep.subr.bf16.mxu0 %v1255
    %1766 = vmatpush1.bf16.msra.mxu0 %v1254
    %1767 = vmatprep.subr.bf16.mxu0 %v1263
    %1768 = vmatpush1.bf16.msra.mxu0 %v1262
    %1769 = vmatprep.subr.bf16.mxu0 %v1271
    %1770 = vmatpush1.bf16.msra.mxu0 %v1270
    %1771 = vmatprep.subr.bf16.mxu0 %v1279
    %1772 = vmatpush1.bf16.msra.mxu0 %v1278
    %1773 = vmatprep.subr.bf16.mxu0 %v1287
    %1774 = vmatpush1.bf16.msra.mxu0 %v1286
    %1775 = vmatprep.subr.bf16.mxu0 %v1295
    %1776 = vmatpush1.bf16.msra.mxu0 %v1294
    %1777 = vmatprep.subr.bf16.mxu0 %v1303
    %1778 = vmatpush1.bf16.msra.mxu0 %v1302
    %1779 = vmatprep.subr.bf16.mxu0 %v1311
    %1780 = vmatpush1.bf16.msra.mxu0 %v1310
    %1781 = vmatprep.subr.bf16.mxu0 %v1319
    %1782 = vmatpush1.bf16.msra.mxu0 %v1318
    %1783 = vmatprep.subr.bf16.mxu0 %v1327
    %1784 = vmatpush1.bf16.msra.mxu0 %v1326
    %1785 = vmatprep.subr.bf16.mxu0 %v1335
    %1786 = vmatpush1.bf16.msra.mxu0 %v1334
    %1787 = vmatprep.subr.bf16.mxu0 %v1343
    %1788 = vmatpush1.bf16.msra.mxu0 %v1342
    %1789 = vmatprep.subr.bf16.mxu0 %v1351
    %1790 = vmatpush1.bf16.msra.mxu0 %v1350
    %1791 = vmatprep.subr.bf16.mxu0 %v1359
    %1792 = vmatpush1.bf16.msra.mxu0 %v1358
    %1793 = vmatprep.subr.bf16.mxu0 %v1367
    %1794 = vmatpush1.bf16.msra.mxu0 %v1366
    %1795 = vmatprep.subr.bf16.mxu0 %v1375
    %1796 = vmatpush1.bf16.msra.mxu0 %v1374
    %1797 = vmatprep.mubr.bf16.mxu0 %v351
    %1798 = vmatmul.mubr.bf16.gmra.mrb[0].mxu0 %v350
    %v1799 = vpop.f32.mrb[0].mxu0
    %v1800 = vadd.f32 %v1757, %v1799
    %v1801 = vpop.f32.mrb[0].mxu0
    %v1802 = vadd.f32 %v1759, %v1801
    %v1803 = vpop.f32.mrb[0].mxu0
    %v1804 = vadd.f32 %v1761, %v1803
    %v1805 = vpop.f32.mrb[0].mxu0
    %v1806 = vadd.f32 %v1763, %v1805
    %1807 = vdwg.mxu0
    %1808 = vmatprep.subr.bf16.mxu0 %v1129
    %1809 = vmatpush1.bf16.msra.mxu0 %v1128
    %1810 = vmatprep.subr.bf16.mxu0 %v1137
    %1811 = vmatpush1.bf16.msra.mxu0 %v1136
    %1812 = vmatprep.subr.bf16.mxu0 %v1145
    %1813 = vmatpush1.bf16.msra.mxu0 %v1144
    %1814 = vmatprep.subr.bf16.mxu0 %v1153
    %1815 = vmatpush1.bf16.msra.mxu0 %v1152
    %1816 = vmatprep.subr.bf16.mxu0 %v1161
    %1817 = vmatpush1.bf16.msra.mxu0 %v1160
    %1818 = vmatprep.subr.bf16.mxu0 %v1169
    %1819 = vmatpush1.bf16.msra.mxu0 %v1168
    %1820 = vmatprep.subr.bf16.mxu0 %v1177
    %1821 = vmatpush1.bf16.msra.mxu0 %v1176
    %1822 = vmatprep.subr.bf16.mxu0 %v1185
    %1823 = vmatpush1.bf16.msra.mxu0 %v1184
    %1824 = vmatprep.subr.bf16.mxu0 %v1193
    %1825 = vmatpush1.bf16.msra.mxu0 %v1192
    %1826 = vmatprep.subr.bf16.mxu0 %v1201
    %1827 = vmatpush1.bf16.msra.mxu0 %v1200
    %1828 = vmatprep.subr.bf16.mxu0 %v1209
    %1829 = vmatpush1.bf16.msra.mxu0 %v1208
    %1830 = vmatprep.subr.bf16.mxu0 %v1217
    %1831 = vmatpush1.bf16.msra.mxu0 %v1216
    %1832 = vmatprep.subr.bf16.mxu0 %v1225
    %1833 = vmatpush1.bf16.msra.mxu0 %v1224
    %1834 = vmatprep.subr.bf16.mxu0 %v1233
    %1835 = vmatpush1.bf16.msra.mxu0 %v1232
    %1836 = vmatprep.subr.bf16.mxu0 %v1241
    %1837 = vmatpush1.bf16.msra.mxu0 %v1240
    %1838 = vmatprep.subr.bf16.mxu0 %v1249
    %1839 = vmatpush1.bf16.msra.mxu0 %v1248
    %1840 = vmatprep.mubr.bf16.mxu0 %v349
    %1841 = vmatmul.mubr.bf16.gmra.mrb[0].mxu0 %v348
    %v1842 = vpop.f32.mrb[0].mxu0
    %v1843 = vadd.f32 %v315, %v1842
    %v1844 = vpop.f32.mrb[0].mxu0
    %v1845 = vadd.f32 %v319, %v1844
    %v1846 = vpop.f32.mrb[0].mxu0
    %v1847 = vadd.f32 %v315, %v1846
    %v1848 = vpop.f32.mrb[0].mxu0
    %v1849 = vadd.f32 %v319, %v1848
    %1850 = vdwg.mxu0
    %1851 = vmatprep.subr.bf16.mxu0 %v1257
    %1852 = vmatpush1.bf16.msra.mxu0 %v1256
    %1853 = vmatprep.subr.bf16.mxu0 %v1265
    %1854 = vmatpush1.bf16.msra.mxu0 %v1264
    %1855 = vmatprep.subr.bf16.mxu0 %v1273
    %1856 = vmatpush1.bf16.msra.mxu0 %v1272
    %1857 = vmatprep.subr.bf16.mxu0 %v1281
    %1858 = vmatpush1.bf16.msra.mxu0 %v1280
    %1859 = vmatprep.subr.bf16.mxu0 %v1289
    %1860 = vmatpush1.bf16.msra.mxu0 %v1288
    %1861 = vmatprep.subr.bf16.mxu0 %v1297
    %1862 = vmatpush1.bf16.msra.mxu0 %v1296
    %1863 = vmatprep.subr.bf16.mxu0 %v1305
    %1864 = vmatpush1.bf16.msra.mxu0 %v1304
    %1865 = vmatprep.subr.bf16.mxu0 %v1313
    %1866 = vmatpush1.bf16.msra.mxu0 %v1312
    %1867 = vmatprep.subr.bf16.mxu0 %v1321
    %1868 = vmatpush1.bf16.msra.mxu0 %v1320
    %1869 = vmatprep.subr.bf16.mxu0 %v1329
    %1870 = vmatpush1.bf16.msra.mxu0 %v1328
    %1871 = vmatprep.subr.bf16.mxu0 %v1337
    %1872 = vmatpush1.bf16.msra.mxu0 %v1336
    %1873 = vmatprep.subr.bf16.mxu0 %v1345
    %1874 = vmatpush1.bf16.msra.mxu0 %v1344
    %1875 = vmatprep.subr.bf16.mxu0 %v1353
    %1876 = vmatpush1.bf16.msra.mxu0 %v1352
    %1877 = vmatprep.subr.bf16.mxu0 %v1361
    %1878 = vmatpush1.bf16.msra.mxu0 %v1360
    %1879 = vmatprep.subr.bf16.mxu0 %v1369
    %1880 = vmatpush1.bf16.msra.mxu0 %v1368
    %1881 = vmatprep.subr.bf16.mxu0 %v1377
    %1882 = vmatpush1.bf16.msra.mxu0 %v1376
    %1883 = vmatprep.mubr.bf16.mxu0 %v351
    %1884 = vmatmul.mubr.bf16.gmra.mrb[0].mxu0 %v350
    %v1885 = vpop.f32.mrb[0].mxu0
    %v1886 = vadd.f32 %v1843, %v1885
    %v1887 = vpop.f32.mrb[0].mxu0
    %v1888 = vadd.f32 %v1845, %v1887
    %v1889 = vpop.f32.mrb[0].mxu0
    %v1890 = vadd.f32 %v1847, %v1889
    %v1891 = vpop.f32.mrb[0].mxu0
    %v1892 = vadd.f32 %v1849, %v1891
    %1893 = vdwg.mxu0
    %1894 = vmatprep.subr.bf16.mxu0 %v1131
    %1895 = vmatpush1.bf16.msra.mxu0 %v1130
    %1896 = vmatprep.subr.bf16.mxu0 %v1139
    %1897 = vmatpush1.bf16.msra.mxu0 %v1138
    %1898 = vmatprep.subr.bf16.mxu0 %v1147
    %1899 = vmatpush1.bf16.msra.mxu0 %v1146
    %1900 = vmatprep.subr.bf16.mxu0 %v1155
    %1901 = vmatpush1.bf16.msra.mxu0 %v1154
    %1902 = vmatprep.subr.bf16.mxu0 %v1163
    %1903 = vmatpush1.bf16.msra.mxu0 %v1162
    %1904 = vmatprep.subr.bf16.mxu0 %v1171
    %1905 = vmatpush1.bf16.msra.mxu0 %v1170
    %1906 = vmatprep.subr.bf16.mxu0 %v1179
    %1907 = vmatpush1.bf16.msra.mxu0 %v1178
    %1908 = vmatprep.subr.bf16.mxu0 %v1187
    %1909 = vmatpush1.bf16.msra.mxu0 %v1186
    %1910 = vmatprep.subr.bf16.mxu0 %v1195
    %1911 = vmatpush1.bf16.msra.mxu0 %v1194
    %1912 = vmatprep.subr.bf16.mxu0 %v1203
    %1913 = vmatpush1.bf16.msra.mxu0 %v1202
    %1914 = vmatprep.subr.bf16.mxu0 %v1211
    %1915 = vmatpush1.bf16.msra.mxu0 %v1210
    %1916 = vmatprep.subr.bf16.mxu0 %v1219
    %1917 = vmatpush1.bf16.msra.mxu0 %v1218
    %1918 = vmatprep.subr.bf16.mxu0 %v1227
    %1919 = vmatpush1.bf16.msra.mxu0 %v1226
    %1920 = vmatprep.subr.bf16.mxu0 %v1235
    %1921 = vmatpush1.bf16.msra.mxu0 %v1234
    %1922 = vmatprep.subr.bf16.mxu0 %v1243
    %1923 = vmatpush1.bf16.msra.mxu0 %v1242
    %1924 = vmatprep.subr.bf16.mxu0 %v1251
    %1925 = vmatpush1.bf16.msra.mxu0 %v1250
    %1926 = vmatprep.mubr.bf16.mxu0 %v349
    %1927 = vmatmul.mubr.bf16.gmra.mrb[0].mxu0 %v348
    %v1928 = vpop.f32.mrb[0].mxu0
    %v1929 = vadd.f32 %v323, %v1928
    %v1930 = vpop.f32.mrb[0].mxu0
    %v1931 = vadd.f32 %v327, %v1930
    %v1932 = vpop.f32.mrb[0].mxu0
    %v1933 = vadd.f32 %v323, %v1932
    %v1934 = vpop.f32.mrb[0].mxu0
    %v1935 = vadd.f32 %v327, %v1934
    %1936 = vdwg.mxu0
    %1937 = vmatprep.subr.bf16.mxu0 %v1259
    %1938 = vmatpush1.bf16.msra.mxu0 %v1258
    %1939 = vmatprep.subr.bf16.mxu0 %v1267
    %1940 = vmatpush1.bf16.msra.mxu0 %v1266
    %1941 = vmatprep.subr.bf16.mxu0 %v1275
    %1942 = vmatpush1.bf16.msra.mxu0 %v1274
    %1943 = vmatprep.subr.bf16.mxu0 %v1283
    %1944 = vmatpush1.bf16.msra.mxu0 %v1282
    %1945 = vmatprep.subr.bf16.mxu0 %v1291
    %1946 = vmatpush1.bf16.msra.mxu0 %v1290
    %1947 = vmatprep.subr.bf16.mxu0 %v1299
    %1948 = vmatpush1.bf16.msra.mxu0 %v1298
    %1949 = vmatprep.subr.bf16.mxu0 %v1307
    %1950 = vmatpush1.bf16.msra.mxu0 %v1306
    %1951 = vmatprep.subr.bf16.mxu0 %v1315
    %1952 = vmatpush1.bf16.msra.mxu0 %v1314
    %1953 = vmatprep.subr.bf16.mxu0 %v1323
    %1954 = vmatpush1.bf16.msra.mxu0 %v1322
    %1955 = vmatprep.subr.bf16.mxu0 %v1331
    %1956 = vmatpush1.bf16.msra.mxu0 %v1330
    %1957 = vmatprep.subr.bf16.mxu0 %v1339
    %1958 = vmatpush1.bf16.msra.mxu0 %v1338
    %1959 = vmatprep.subr.bf16.mxu0 %v1347
    %1960 = vmatpush1.bf16.msra.mxu0 %v1346
    %1961 = vmatprep.subr.bf16.mxu0 %v1355
    %1962 = vmatpush1.bf16.msra.mxu0 %v1354
    %1963 = vmatprep.subr.bf16.mxu0 %v1363
    %1964 = vmatpush1.bf16.msra.mxu0 %v1362
    %1965 = vmatprep.subr.bf16.mxu0 %v1371
    %1966 = vmatpush1.bf16.msra.mxu0 %v1370
    %1967 = vmatprep.subr.bf16.mxu0 %v1379
    %1968 = vmatpush1.bf16.msra.mxu0 %v1378
    %1969 = vmatprep.mubr.bf16.mxu0 %v351
    %1970 = vmatmul.mubr.bf16.gmra.mrb[0].mxu0 %v350
    %v1971 = vpop.f32.mrb[0].mxu0
    %v1972 = vadd.f32 %v1929, %v1971
    %v1973 = vpop.f32.mrb[0].mxu0
    %v1974 = vadd.f32 %v1931, %v1973
    %v1975 = vpop.f32.mrb[0].mxu0
    %v1976 = vadd.f32 %v1933, %v1975
    %v1977 = vpop.f32.mrb[0].mxu0
    %v1978 = vadd.f32 %v1935, %v1977
    %1979 = vdwg.mxu0
    %v1980 = vmax.f32 %v1714, 0.0
    %v1981 = vmax.f32 %v1716, 0.0
    %v1982 = vmax.f32 %v1800, 0.0
    %v1983 = vmax.f32 %v1802, 0.0
    %v1984 = vmax.f32 %v1886, 0.0
    %v1985 = vmax.f32 %v1888, 0.0
    %v1986 = vmax.f32 %v1972, 0.0
    %v1987 = vmax.f32 %v1974, 0.0
    %v1988 = vmax.f32 %v1718, 0.0
    %v1989 = vmax.f32 %v1720, 0.0
    %v1990 = vmax.f32 %v1804, 0.0
    %v1991 = vmax.f32 %v1806, 0.0
    %v1992 = vmax.f32 %v1890, 0.0
    %v1993 = vmax.f32 %v1892, 0.0
    %v1994 = vmax.f32 %v1976, 0.0
    %v1995 = vmax.f32 %v1978, 0.0
    %v1996 = vld [vmem:[%s3] sm:$0xff]
    %v1997 = vld [vmem:[%s3 + $0x8] sm:$0xff]
    %v1998 = vld [vmem:[%s3 + $0x10] sm:$0xff]
    %v1999 = vld [vmem:[%s3 + $0x18] sm:$0xff]
    %v2000 = vld [vmem:[%s3 + $0x20] sm:$0xff]
    %v2001 = vld [vmem:[%s3 + $0x28] sm:$0xff]
    %v2002 = vld [vmem:[%s3 + $0x30] sm:$0xff]
    %v2003 = vld [vmem:[%s3 + $0x38] sm:$0xff]
    %v2004 = vld [vmem:[%s3 + $0x40] sm:$0xff]
    %v2005 = vld [vmem:[%s3 + $0x48] sm:$0xff]
    %v2006 = vld [vmem:[%s3 + $0x50] sm:$0xff]
    %v2007 = vld [vmem:[%s3 + $0x58] sm:$0xff]
    %v2008 = vld [vmem:[%s3 + $0x60] sm:$0xff]
    %v2009 = vld [vmem:[%s3 + $0x68] sm:$0xff]
    %v2010 = vld [vmem:[%s3 + $0x70] sm:$0xff]
    %v2011 = vld [vmem:[%s3 + $0x78] sm:$0xff]
    %v2012 = vld [vmem:[%s3 + $0x80] sm:$0xff]
    %v2013 = vld [vmem:[%s3 + $0x88] sm:$0xff]
    %v2014 = vld [vmem:[%s3 + $0x90] sm:$0xff]
    %v2015 = vld [vmem:[%s3 + $0x98] sm:$0xff]
    %v2016 = vld [vmem:[%s3 + $0xa0] sm:$0xff]
    %v2017 = vld [vmem:[%s3 + $0xa8] sm:$0xff]
    %v2018 = vld [vmem:[%s3 + $0xb0] sm:$0xff]
    %v2019 = vld [vmem:[%s3 + $0xb8] sm:$0xff]
    %v2020 = vld [vmem:[%s3 + $0xc0] sm:$0xff]
    %v2021 = vld [vmem:[%s3 + $0xc8] sm:$0xff]
    %v2022 = vld [vmem:[%s3 + $0xd0] sm:$0xff]
    %v2023 = vld [vmem:[%s3 + $0xd8] sm:$0xff]
    %v2024 = vld [vmem:[%s3 + $0xe0] sm:$0xff]
    %v2025 = vld [vmem:[%s3 + $0xe8] sm:$0xff]
    %v2026 = vld [vmem:[%s3 + $0xf0] sm:$0xff]
    %v2027 = vld [vmem:[%s3 + $0xf8] sm:$0xff]
    %v2028 = vld [vmem:[%s3 + $0x100] sm:$0xff]
    %v2029 = vld [vmem:[%s3 + $0x108] sm:$0xff]
    %v2030 = vld [vmem:[%s3 + $0x110] sm:$0xff]
    %v2031 = vld [vmem:[%s3 + $0x118] sm:$0xff]
    %v2032 = vld [vmem:[%s3 + $0x120] sm:$0xff]
    %v2033 = vld [vmem:[%s3 + $0x128] sm:$0xff]
    %v2034 = vld [vmem:[%s3 + $0x130] sm:$0xff]
    %v2035 = vld [vmem:[%s3 + $0x138] sm:$0xff]
    %v2036 = vld [vmem:[%s3 + $0x140] sm:$0xff]
    %v2037 = vld [vmem:[%s3 + $0x148] sm:$0xff]
    %v2038 = vld [vmem:[%s3 + $0x150] sm:$0xff]
    %v2039 = vld [vmem:[%s3 + $0x158] sm:$0xff]
    %v2040 = vld [vmem:[%s3 + $0x160] sm:$0xff]
    %v2041 = vld [vmem:[%s3 + $0x168] sm:$0xff]
    %v2042 = vld [vmem:[%s3 + $0x170] sm:$0xff]
    %v2043 = vld [vmem:[%s3 + $0x178] sm:$0xff]
    %v2044 = vld [vmem:[%s3 + $0x180] sm:$0xff]
    %v2045 = vld [vmem:[%s3 + $0x188] sm:$0xff]
    %v2046 = vld [vmem:[%s3 + $0x190] sm:$0xff]
    %v2047 = vld [vmem:[%s3 + $0x198] sm:$0xff]
    %v2048 = vld [vmem:[%s3 + $0x1a0] sm:$0xff]
    %v2049 = vld [vmem:[%s3 + $0x1a8] sm:$0xff]
    %v2050 = vld [vmem:[%s3 + $0x1b0] sm:$0xff]
    %v2051 = vld [vmem:[%s3 + $0x1b8] sm:$0xff]
    %v2052 = vld [vmem:[%s3 + $0x1c0] sm:$0xff]
    %v2053 = vld [vmem:[%s3 + $0x1c8] sm:$0xff]
    %v2054 = vld [vmem:[%s3 + $0x1d0] sm:$0xff]
    %v2055 = vld [vmem:[%s3 + $0x1d8] sm:$0xff]
    %v2056 = vld [vmem:[%s3 + $0x1e0] sm:$0xff]
    %v2057 = vld [vmem:[%s3 + $0x1e8] sm:$0xff]
    %v2058 = vld [vmem:[%s3 + $0x1f0] sm:$0xff]
    %v2059 = vld [vmem:[%s3 + $0x1f8] sm:$0xff]
    %v2060 = vld [vmem:[%s3 + $0x200] sm:$0xff]
    %v2061 = vld [vmem:[%s3 + $0x208] sm:$0xff]
    %v2062 = vld [vmem:[%s3 + $0x210] sm:$0xff]
    %v2063 = vld [vmem:[%s3 + $0x218] sm:$0xff]
    %v2064 = vld [vmem:[%s3 + $0x220] sm:$0xff]
    %v2065 = vld [vmem:[%s3 + $0x228] sm:$0xff]
    %v2066 = vld [vmem:[%s3 + $0x230] sm:$0xff]
    %v2067 = vld [vmem:[%s3 + $0x238] sm:$0xff]
    %v2068 = vld [vmem:[%s3 + $0x240] sm:$0xff]
    %v2069 = vld [vmem:[%s3 + $0x248] sm:$0xff]
    %v2070 = vld [vmem:[%s3 + $0x250] sm:$0xff]
    %v2071 = vld [vmem:[%s3 + $0x258] sm:$0xff]
    %v2072 = vld [vmem:[%s3 + $0x260] sm:$0xff]
    %v2073 = vld [vmem:[%s3 + $0x268] sm:$0xff]
    %v2074 = vld [vmem:[%s3 + $0x270] sm:$0xff]
    %v2075 = vld [vmem:[%s3 + $0x278] sm:$0xff]
    %v2076 = vld [vmem:[%s3 + $0x280] sm:$0xff]
    %v2077 = vld [vmem:[%s3 + $0x288] sm:$0xff]
    %v2078 = vld [vmem:[%s3 + $0x290] sm:$0xff]
    %v2079 = vld [vmem:[%s3 + $0x298] sm:$0xff]
    %v2080 = vld [vmem:[%s3 + $0x2a0] sm:$0xff]
    %v2081 = vld [vmem:[%s3 + $0x2a8] sm:$0xff]
    %v2082 = vld [vmem:[%s3 + $0x2b0] sm:$0xff]
    %v2083 = vld [vmem:[%s3 + $0x2b8] sm:$0xff]
    %v2084 = vld [vmem:[%s3 + $0x2c0] sm:$0xff]
    %v2085 = vld [vmem:[%s3 + $0x2c8] sm:$0xff]
    %v2086 = vld [vmem:[%s3 + $0x2d0] sm:$0xff]
    %v2087 = vld [vmem:[%s3 + $0x2d8] sm:$0xff]
    %v2088 = vld [vmem:[%s3 + $0x2e0] sm:$0xff]
    %v2089 = vld [vmem:[%s3 + $0x2e8] sm:$0xff]
    %v2090 = vld [vmem:[%s3 + $0x2f0] sm:$0xff]
    %v2091 = vld [vmem:[%s3 + $0x2f8] sm:$0xff]
    %v2092 = vld [vmem:[%s3 + $0x300] sm:$0xff]
    %v2093 = vld [vmem:[%s3 + $0x308] sm:$0xff]
    %v2094 = vld [vmem:[%s3 + $0x310] sm:$0xff]
    %v2095 = vld [vmem:[%s3 + $0x318] sm:$0xff]
    %v2096 = vld [vmem:[%s3 + $0x320] sm:$0xff]
    %v2097 = vld [vmem:[%s3 + $0x328] sm:$0xff]
    %v2098 = vld [vmem:[%s3 + $0x330] sm:$0xff]
    %v2099 = vld [vmem:[%s3 + $0x338] sm:$0xff]
    %v2100 = vld [vmem:[%s3 + $0x340] sm:$0xff]
    %v2101 = vld [vmem:[%s3 + $0x348] sm:$0xff]
    %v2102 = vld [vmem:[%s3 + $0x350] sm:$0xff]
    %v2103 = vld [vmem:[%s3 + $0x358] sm:$0xff]
    %v2104 = vld [vmem:[%s3 + $0x360] sm:$0xff]
    %v2105 = vld [vmem:[%s3 + $0x368] sm:$0xff]
    %v2106 = vld [vmem:[%s3 + $0x370] sm:$0xff]
    %v2107 = vld [vmem:[%s3 + $0x378] sm:$0xff]
    %v2108 = vld [vmem:[%s3 + $0x380] sm:$0xff]
    %v2109 = vld [vmem:[%s3 + $0x388] sm:$0xff]
    %v2110 = vld [vmem:[%s3 + $0x390] sm:$0xff]
    %v2111 = vld [vmem:[%s3 + $0x398] sm:$0xff]
    %v2112 = vld [vmem:[%s3 + $0x3a0] sm:$0xff]
    %v2113 = vld [vmem:[%s3 + $0x3a8] sm:$0xff]
    %v2114 = vld [vmem:[%s3 + $0x3b0] sm:$0xff]
    %v2115 = vld [vmem:[%s3 + $0x3b8] sm:$0xff]
    %v2116 = vld [vmem:[%s3 + $0x3c0] sm:$0xff]
    %v2117 = vld [vmem:[%s3 + $0x3c8] sm:$0xff]
    %v2118 = vld [vmem:[%s3 + $0x3d0] sm:$0xff]
    %v2119 = vld [vmem:[%s3 + $0x3d8] sm:$0xff]
    %v2120 = vld [vmem:[%s3 + $0x3e0] sm:$0xff]
    %v2121 = vld [vmem:[%s3 + $0x3e8] sm:$0xff]
    %v2122 = vld [vmem:[%s3 + $0x3f0] sm:$0xff]
    %v2123 = vld [vmem:[%s3 + $0x3f8] sm:$0xff]
    %v2124 = vld [vmem:[%s4] sm:$0x1]
    %v2126 = vlaneseq
    %v2127 = vshrl.u32 %v2126, 7
    %v2128 = vsub.s32 0, %v2127
    %v2129 = vrot.slane %v2124, %v2128
    %2131 = vmatprep.subr.mxu0 0.0
    %2132 = vmatpush1.msra.mxu0 %v1996
    %2133 = vmatprep.subr.mxu0 0.0
    %2134 = vmatpush1.msra.mxu0 %v1997
    %2135 = vmatprep.subr.mxu0 0.0
    %2136 = vmatpush1.msra.mxu0 %v1998
    %2137 = vmatprep.subr.mxu0 0.0
    %2138 = vmatpush1.msra.mxu0 %v1999
    %2139 = vmatprep.subr.mxu0 0.0
    %2140 = vmatpush1.msra.mxu0 %v2000
    %2141 = vmatprep.subr.mxu0 0.0
    %2142 = vmatpush1.msra.mxu0 %v2001
    %2143 = vmatprep.subr.mxu0 0.0
    %2144 = vmatpush1.msra.mxu0 %v2002
    %2145 = vmatprep.subr.mxu0 0.0
    %2146 = vmatpush1.msra.mxu0 %v2003
    %2147 = vmatprep.subr.mxu0 0.0
    %2148 = vmatpush1.msra.mxu0 %v2004
    %2149 = vmatprep.subr.mxu0 0.0
    %2150 = vmatpush1.msra.mxu0 %v2005
    %2151 = vmatprep.subr.mxu0 0.0
    %2152 = vmatpush1.msra.mxu0 %v2006
    %2153 = vmatprep.subr.mxu0 0.0
    %2154 = vmatpush1.msra.mxu0 %v2007
    %2155 = vmatprep.subr.mxu0 0.0
    %2156 = vmatpush1.msra.mxu0 %v2008
    %2157 = vmatprep.subr.mxu0 0.0
    %2158 = vmatpush1.msra.mxu0 %v2009
    %2159 = vmatprep.subr.mxu0 0.0
    %2160 = vmatpush1.msra.mxu0 %v2010
    %2161 = vmatprep.subr.mxu0 0.0
    %2162 = vmatpush1.msra.mxu0 %v2011
    %2163 = vmatprep.subr.mxu0 0.0
    %2164 = vmatpush1.msra.mxu0 %v2012
    %2165 = vmatprep.subr.mxu0 0.0
    %2166 = vmatpush1.msra.mxu0 %v2013
    %2167 = vmatprep.subr.mxu0 0.0
    %2168 = vmatpush1.msra.mxu0 %v2014
    %2169 = vmatprep.subr.mxu0 0.0
    %2170 = vmatpush1.msra.mxu0 %v2015
    %2171 = vmatprep.subr.mxu0 0.0
    %2172 = vmatpush1.msra.mxu0 %v2016
    %2173 = vmatprep.subr.mxu0 0.0
    %2174 = vmatpush1.msra.mxu0 %v2017
    %2175 = vmatprep.subr.mxu0 0.0
    %2176 = vmatpush1.msra.mxu0 %v2018
    %2177 = vmatprep.subr.mxu0 0.0
    %2178 = vmatpush1.msra.mxu0 %v2019
    %2179 = vmatprep.subr.mxu0 0.0
    %2180 = vmatpush1.msra.mxu0 %v2020
    %2181 = vmatprep.subr.mxu0 0.0
    %2182 = vmatpush1.msra.mxu0 %v2021
    %2183 = vmatprep.subr.mxu0 0.0
    %2184 = vmatpush1.msra.mxu0 %v2022
    %2185 = vmatprep.subr.mxu0 0.0
    %2186 = vmatpush1.msra.mxu0 %v2023
    %2187 = vmatprep.subr.mxu0 0.0
    %2188 = vmatpush1.msra.mxu0 %v2024
    %2189 = vmatprep.subr.mxu0 0.0
    %2190 = vmatpush1.msra.mxu0 %v2025
    %2191 = vmatprep.subr.mxu0 0.0
    %2192 = vmatpush1.msra.mxu0 %v2026
    %2193 = vmatprep.subr.mxu0 0.0
    %2194 = vmatpush1.msra.mxu0 %v2027
    %2195 = vmatprep.mubr.f32.mxu0 %v1981
    %2196 = vmatmul.mubr.f32.gmra.mrb[0].mxu0 %v1980
    %v2197 = vpop.f32.mrb[0].mxu0
    %v2198 = vadd.f32 %v2129, %v2197
    %v2199 = vpop.f32.mrb[0].mxu0
    %2200 = vmatprep.mubr.f32.mxu0 %v1989
    %2201 = vmatmul.mubr.f32.gmra.mrb[0].mxu0 %v1988
    %v2202 = vpop.f32.mrb[0].mxu0
    %v2203 = vadd.f32 %v2129, %v2202
    %v2204 = vpop.f32.mrb[0].mxu0
    %2205 = vdwg.mxu0
    %2206 = vmatprep.subr.mxu0 0.0
    %2207 = vmatpush1.msra.mxu0 %v2028
    %2208 = vmatprep.subr.mxu0 0.0
    %2209 = vmatpush1.msra.mxu0 %v2029
    %2210 = vmatprep.subr.mxu0 0.0
    %2211 = vmatpush1.msra.mxu0 %v2030
    %2212 = vmatprep.subr.mxu0 0.0
    %2213 = vmatpush1.msra.mxu0 %v2031
    %2214 = vmatprep.subr.mxu0 0.0
    %2215 = vmatpush1.msra.mxu0 %v2032
    %2216 = vmatprep.subr.mxu0 0.0
    %2217 = vmatpush1.msra.mxu0 %v2033
    %2218 = vmatprep.subr.mxu0 0.0
    %2219 = vmatpush1.msra.mxu0 %v2034
    %2220 = vmatprep.subr.mxu0 0.0
    %2221 = vmatpush1.msra.mxu0 %v2035
    %2222 = vmatprep.subr.mxu0 0.0
    %2223 = vmatpush1.msra.mxu0 %v2036
    %2224 = vmatprep.subr.mxu0 0.0
    %2225 = vmatpush1.msra.mxu0 %v2037
    %2226 = vmatprep.subr.mxu0 0.0
    %2227 = vmatpush1.msra.mxu0 %v2038
    %2228 = vmatprep.subr.mxu0 0.0
    %2229 = vmatpush1.msra.mxu0 %v2039
    %2230 = vmatprep.subr.mxu0 0.0
    %2231 = vmatpush1.msra.mxu0 %v2040
    %2232 = vmatprep.subr.mxu0 0.0
    %2233 = vmatpush1.msra.mxu0 %v2041
    %2234 = vmatprep.subr.mxu0 0.0
    %2235 = vmatpush1.msra.mxu0 %v2042
    %2236 = vmatprep.subr.mxu0 0.0
    %2237 = vmatpush1.msra.mxu0 %v2043
    %2238 = vmatprep.subr.mxu0 0.0
    %2239 = vmatpush1.msra.mxu0 %v2044
    %2240 = vmatprep.subr.mxu0 0.0
    %2241 = vmatpush1.msra.mxu0 %v2045
    %2242 = vmatprep.subr.mxu0 0.0
    %2243 = vmatpush1.msra.mxu0 %v2046
    %2244 = vmatprep.subr.mxu0 0.0
    %2245 = vmatpush1.msra.mxu0 %v2047
    %2246 = vmatprep.subr.mxu0 0.0
    %2247 = vmatpush1.msra.mxu0 %v2048
    %2248 = vmatprep.subr.mxu0 0.0
    %2249 = vmatpush1.msra.mxu0 %v2049
    %2250 = vmatprep.subr.mxu0 0.0
    %2251 = vmatpush1.msra.mxu0 %v2050
    %2252 = vmatprep.subr.mxu0 0.0
    %2253 = vmatpush1.msra.mxu0 %v2051
    %2254 = vmatprep.subr.mxu0 0.0
    %2255 = vmatpush1.msra.mxu0 %v2052
    %2256 = vmatprep.subr.mxu0 0.0
    %2257 = vmatpush1.msra.mxu0 %v2053
    %2258 = vmatprep.subr.mxu0 0.0
    %2259 = vmatpush1.msra.mxu0 %v2054
    %2260 = vmatprep.subr.mxu0 0.0
    %2261 = vmatpush1.msra.mxu0 %v2055
    %2262 = vmatprep.subr.mxu0 0.0
    %2263 = vmatpush1.msra.mxu0 %v2056
    %2264 = vmatprep.subr.mxu0 0.0
    %2265 = vmatpush1.msra.mxu0 %v2057
    %2266 = vmatprep.subr.mxu0 0.0
    %2267 = vmatpush1.msra.mxu0 %v2058
    %2268 = vmatprep.subr.mxu0 0.0
    %2269 = vmatpush1.msra.mxu0 %v2059
    %2270 = vmatprep.mubr.f32.mxu0 %v1983
    %2271 = vmatmul.mubr.f32.gmra.mrb[0].mxu0 %v1982
    %v2272 = vpop.f32.mrb[0].mxu0
    %v2273 = vadd.f32 %v2198, %v2272
    %v2274 = vpop.f32.mrb[0].mxu0
    %2275 = vmatprep.mubr.f32.mxu0 %v1991
    %2276 = vmatmul.mubr.f32.gmra.mrb[0].mxu0 %v1990
    %v2277 = vpop.f32.mrb[0].mxu0
    %v2278 = vadd.f32 %v2203, %v2277
    %v2279 = vpop.f32.mrb[0].mxu0
    %2280 = vdwg.mxu0
    %2281 = vmatprep.subr.mxu0 0.0
    %2282 = vmatpush1.msra.mxu0 %v2060
    %2283 = vmatprep.subr.mxu0 0.0
    %2284 = vmatpush1.msra.mxu0 %v2061
    %2285 = vmatprep.subr.mxu0 0.0
    %2286 = vmatpush1.msra.mxu0 %v2062
    %2287 = vmatprep.subr.mxu0 0.0
    %2288 = vmatpush1.msra.mxu0 %v2063
    %2289 = vmatprep.subr.mxu0 0.0
    %2290 = vmatpush1.msra.mxu0 %v2064
    %2291 = vmatprep.subr.mxu0 0.0
    %2292 = vmatpush1.msra.mxu0 %v2065
    %2293 = vmatprep.subr.mxu0 0.0
    %2294 = vmatpush1.msra.mxu0 %v2066
    %2295 = vmatprep.subr.mxu0 0.0
    %2296 = vmatpush1.msra.mxu0 %v2067
    %2297 = vmatprep.subr.mxu0 0.0
    %2298 = vmatpush1.msra.mxu0 %v2068
    %2299 = vmatprep.subr.mxu0 0.0
    %2300 = vmatpush1.msra.mxu0 %v2069
    %2301 = vmatprep.subr.mxu0 0.0
    %2302 = vmatpush1.msra.mxu0 %v2070
    %2303 = vmatprep.subr.mxu0 0.0
    %2304 = vmatpush1.msra.mxu0 %v2071
    %2305 = vmatprep.subr.mxu0 0.0
    %2306 = vmatpush1.msra.mxu0 %v2072
    %2307 = vmatprep.subr.mxu0 0.0
    %2308 = vmatpush1.msra.mxu0 %v2073
    %2309 = vmatprep.subr.mxu0 0.0
    %2310 = vmatpush1.msra.mxu0 %v2074
    %2311 = vmatprep.subr.mxu0 0.0
    %2312 = vmatpush1.msra.mxu0 %v2075
    %2313 = vmatprep.subr.mxu0 0.0
    %2314 = vmatpush1.msra.mxu0 %v2076
    %2315 = vmatprep.subr.mxu0 0.0
    %2316 = vmatpush1.msra.mxu0 %v2077
    %2317 = vmatprep.subr.mxu0 0.0
    %2318 = vmatpush1.msra.mxu0 %v2078
    %2319 = vmatprep.subr.mxu0 0.0
    %2320 = vmatpush1.msra.mxu0 %v2079
    %2321 = vmatprep.subr.mxu0 0.0
    %2322 = vmatpush1.msra.mxu0 %v2080
    %2323 = vmatprep.subr.mxu0 0.0
    %2324 = vmatpush1.msra.mxu0 %v2081
    %2325 = vmatprep.subr.mxu0 0.0
    %2326 = vmatpush1.msra.mxu0 %v2082
    %2327 = vmatprep.subr.mxu0 0.0
    %2328 = vmatpush1.msra.mxu0 %v2083
    %2329 = vmatprep.subr.mxu0 0.0
    %2330 = vmatpush1.msra.mxu0 %v2084
    %2331 = vmatprep.subr.mxu0 0.0
    %2332 = vmatpush1.msra.mxu0 %v2085
    %2333 = vmatprep.subr.mxu0 0.0
    %2334 = vmatpush1.msra.mxu0 %v2086
    %2335 = vmatprep.subr.mxu0 0.0
    %2336 = vmatpush1.msra.mxu0 %v2087
    %2337 = vmatprep.subr.mxu0 0.0
    %2338 = vmatpush1.msra.mxu0 %v2088
    %2339 = vmatprep.subr.mxu0 0.0
    %2340 = vmatpush1.msra.mxu0 %v2089
    %2341 = vmatprep.subr.mxu0 0.0
    %2342 = vmatpush1.msra.mxu0 %v2090
    %2343 = vmatprep.subr.mxu0 0.0
    %2344 = vmatpush1.msra.mxu0 %v2091
    %2345 = vmatprep.mubr.f32.mxu0 %v1985
    %2346 = vmatmul.mubr.f32.gmra.mrb[0].mxu0 %v1984
    %v2347 = vpop.f32.mrb[0].mxu0
    %v2348 = vadd.f32 %v2273, %v2347
    %v2349 = vpop.f32.mrb[0].mxu0
    %2350 = vmatprep.mubr.f32.mxu0 %v1993
    %2351 = vmatmul.mubr.f32.gmra.mrb[0].mxu0 %v1992
    %v2352 = vpop.f32.mrb[0].mxu0
    %v2353 = vadd.f32 %v2278, %v2352
    %v2354 = vpop.f32.mrb[0].mxu0
    %2355 = vdwg.mxu0
    %2356 = vmatprep.subr.mxu0 0.0
    %2357 = vmatpush1.msra.mxu0 %v2092
    %2358 = vmatprep.subr.mxu0 0.0
    %2359 = vmatpush1.msra.mxu0 %v2093
    %2360 = vmatprep.subr.mxu0 0.0
    %2361 = vmatpush1.msra.mxu0 %v2094
    %2362 = vmatprep.subr.mxu0 0.0
    %2363 = vmatpush1.msra.mxu0 %v2095
    %2364 = vmatprep.subr.mxu0 0.0
    %2365 = vmatpush1.msra.mxu0 %v2096
    %2366 = vmatprep.subr.mxu0 0.0
    %2367 = vmatpush1.msra.mxu0 %v2097
    %2368 = vmatprep.subr.mxu0 0.0
    %2369 = vmatpush1.msra.mxu0 %v2098
    %2370 = vmatprep.subr.mxu0 0.0
    %2371 = vmatpush1.msra.mxu0 %v2099
    %2372 = vmatprep.subr.mxu0 0.0
    %2373 = vmatpush1.msra.mxu0 %v2100
    %2374 = vmatprep.subr.mxu0 0.0
    %2375 = vmatpush1.msra.mxu0 %v2101
    %2376 = vmatprep.subr.mxu0 0.0
    %2377 = vmatpush1.msra.mxu0 %v2102
    %2378 = vmatprep.subr.mxu0 0.0
    %2379 = vmatpush1.msra.mxu0 %v2103
    %2380 = vmatprep.subr.mxu0 0.0
    %2381 = vmatpush1.msra.mxu0 %v2104
    %2382 = vmatprep.subr.mxu0 0.0
    %2383 = vmatpush1.msra.mxu0 %v2105
    %2384 = vmatprep.subr.mxu0 0.0
    %2385 = vmatpush1.msra.mxu0 %v2106
    %2386 = vmatprep.subr.mxu0 0.0
    %2387 = vmatpush1.msra.mxu0 %v2107
    %2388 = vmatprep.subr.mxu0 0.0
    %2389 = vmatpush1.msra.mxu0 %v2108
    %2390 = vmatprep.subr.mxu0 0.0
    %2391 = vmatpush1.msra.mxu0 %v2109
    %2392 = vmatprep.subr.mxu0 0.0
    %2393 = vmatpush1.msra.mxu0 %v2110
    %2394 = vmatprep.subr.mxu0 0.0
    %2395 = vmatpush1.msra.mxu0 %v2111
    %2396 = vmatprep.subr.mxu0 0.0
    %2397 = vmatpush1.msra.mxu0 %v2112
    %2398 = vmatprep.subr.mxu0 0.0
    %2399 = vmatpush1.msra.mxu0 %v2113
    %2400 = vmatprep.subr.mxu0 0.0
    %2401 = vmatpush1.msra.mxu0 %v2114
    %2402 = vmatprep.subr.mxu0 0.0
    %2403 = vmatpush1.msra.mxu0 %v2115
    %2404 = vmatprep.subr.mxu0 0.0
    %2405 = vmatpush1.msra.mxu0 %v2116
    %2406 = vmatprep.subr.mxu0 0.0
    %2407 = vmatpush1.msra.mxu0 %v2117
    %2408 = vmatprep.subr.mxu0 0.0
    %2409 = vmatpush1.msra.mxu0 %v2118
    %2410 = vmatprep.subr.mxu0 0.0
    %2411 = vmatpush1.msra.mxu0 %v2119
    %2412 = vmatprep.subr.mxu0 0.0
    %2413 = vmatpush1.msra.mxu0 %v2120
    %2414 = vmatprep.subr.mxu0 0.0
    %2415 = vmatpush1.msra.mxu0 %v2121
    %2416 = vmatprep.subr.mxu0 0.0
    %2417 = vmatpush1.msra.mxu0 %v2122
    %2418 = vmatprep.subr.mxu0 0.0
    %2419 = vmatpush1.msra.mxu0 %v2123
    %2420 = vmatprep.mubr.f32.mxu0 %v1987
    %2421 = vmatmul.mubr.f32.gmra.mrb[0].mxu0 %v1986
    %v2422 = vpop.f32.mrb[0].mxu0
    %v2423 = vadd.f32 %v2348, %v2422
    %v2424 = vpop.f32.mrb[0].mxu0
    %2425 = vmatprep.mubr.f32.mxu0 %v1995
    %2426 = vmatmul.mubr.f32.gmra.mrb[0].mxu0 %v1994
    %v2427 = vpop.f32.mrb[0].mxu0
    %v2428 = vadd.f32 %v2353, %v2427
    %v2429 = vpop.f32.mrb[0].mxu0
    %2430 = vdwg.mxu0
    %vm2431 = vcmask 23552
    %2432 = vst.msk [vmem:[%s5] sm:$0xff] %vm2431, %v2423
    %2433 = vst.msk [vmem:[%s5 + $0x8] sm:$0xff] %vm2431, %v2428
    // Predicated region
    $region26: #{classifier_forward.1} parent=1 // pred_check
      _
    $region27: #{classifier_forward.1} parent=1 // pred_check_branch
      %2435 = sbr.rel (0) target = $region29
    $region28: #{classifier_forward.1} parent=1 // pred_region
      _
    $region29: #{classifier_forward.1} parent=1 // pred_fallthru
      _
    // Predicated region
    $region30: #{classifier_forward.1} parent=1 // pred_check
      _
    $region31: #{classifier_forward.1} parent=1 // pred_check_branch
      %2437 = sbr.rel (0) target = $region33
    $region32: #{classifier_forward.1} parent=1 // pred_region
      _
    $region33: #{classifier_forward.1} parent=1 // pred_fallthru
      _
    %2438 = vsyncpa [#allocation3], 1

</llo_original>
